<compile_context>
chip_gen: v6e
topology: v6e:2x2x1
jax: 0.10.0
libtpu: 0.0.40
codegen_flags: <defaults>
</compile_context>

<pallas_src>
import jax
import jax.numpy as jnp
from jax import lax
from jax.experimental import pallas as pl
from jax.experimental.pallas import tpu as pltpu

EPS = 1e-5   # nn.BatchNorm2d default eps
K4 = 4       # every conv in the Discriminator is 4x4


def _make_layer_kernel(slope):
    """Fused conv(im2col matmul) + folded bias/BatchNorm affine (+ LeakyReLU) kernel."""

    def kernel(p_ref, w_ref, scale_ref, shift_ref, o_ref):
        # p_ref: (K, M) im2col patches for one sample, K = 16*Cin, M = Hout*Wout
        # w_ref: (Cout, K) flattened conv weights
        # One MXU matmul over the fully fused contraction K.
        y = jnp.dot(w_ref[...], p_ref[...],
                    preferred_element_type=jnp.float32)          # (Cout, M)
        # Folded conv-bias + eval-mode BatchNorm: per-channel affine.
        y = y * scale_ref[...] + shift_ref[...]                  # scale/shift: (Cout, 1)
        if slope is not None:                                    # LeakyReLU(0.2); last layer skips it
            y = jnp.where(y >= 0.0, y, slope * y)
        o_ref[...] = y.astype(o_ref.dtype)                       # lane-dense (Cout, M) store

    return kernel


def _im2col_nchw(xp, stride, h_out, w_out):
    """Zero-padded NCHW input (N, C, Hp, Wp) -> (N, 16*C, Hout*Wout) patches.

    K ordering is c*16 + (a*4 + b), which matches PyTorch weight (Cout, Cin, 4, 4)
    flattened row-major — so the weight needs no transpose at all. Pure layout; all
    FLOPs stay inside the Pallas kernel."""
    n, c, _, _ = xp.shape
    taps = []
    for a in range(K4):
        for b in range(K4):
            taps.append(xp[:, :,
                           a:a + stride * (h_out - 1) + 1:stride,
                           b:b + stride * (w_out - 1) + 1:stride])   # (N, C, Hout, Wout)
    p = jnp.stack(taps, axis=2)                                      # (N, C, 16, Hout, Wout)
    return p.reshape(n, c * K4 * K4, h_out * w_out)                  # (N, K, M)


def _conv_bn_act_layer(x, w, b, bn, stride, slope):
    """One Discriminator block: Conv4x4(stride, pad=1) [+ BatchNorm] [+ LeakyReLU].

    x: (N, C, H, W) NCHW; w: PyTorch layout (Cout, Cin, 4, 4); b: (Cout,) or None;
    bn: (gamma, beta, running_mean, running_var) or None."""
    n, c_in, h, wdim = x.shape
    c_out = w.shape[0]
    h_out = (h + 2 - K4) // stride + 1
    w_out = (wdim + 2 - K4) // stride + 1
    m = h_out * w_out
    k_dim = K4 * K4 * c_in

    # Pad + im2col in the wrapper (layout only).
    xp = jnp.pad(x, ((0, 0), (0, 0), (1, 1), (1, 1)))
    patches = _im2col_nchw(xp, stride, h_out, w_out)                 # (N, K, M)
    wflat = w.reshape(c_out, k_dim)                                  # (Cout, K)

    # Fold conv bias + eval-mode BatchNorm into one per-channel scale/shift.
    bias = b if b is not None else jnp.zeros((c_out,), x.dtype)
    if bn is not None:
        gamma, beta, mean, var = bn
        scale = gamma * lax.rsqrt(var + EPS)
        shift = (bias - mean) * scale + beta
    else:
        scale = jnp.ones((c_out,), x.dtype)
        shift = bias
    scale_c = scale.reshape(c_out, 1)
    shift_c = shift.reshape(c_out, 1)

    out = pl.pallas_call(
        _make_layer_kernel(slope),
        out_shape=jax.ShapeDtypeStruct((n, c_out, m), x.dtype),
        grid_spec=pltpu.PrefetchScalarGridSpec(
            num_scalar_prefetch=0,
            grid=(n,),                                               # one sample per step; N>=2 parallel steps
            in_specs=[
                pl.BlockSpec((None, k_dim, m), lambda i: (i, 0, 0)), # patches
                pl.BlockSpec((c_out, k_dim), lambda i: (0, 0)),      # weights (resident)
                pl.BlockSpec((c_out, 1), lambda i: (0, 0)),          # folded scale
                pl.BlockSpec((c_out, 1), lambda i: (0, 0)),          # folded shift
            ],
            out_specs=pl.BlockSpec((None, c_out, m), lambda i: (i, 0, 0)),
        ),
        compiler_params=pltpu.CompilerParams(
            dimension_semantics=("parallel",),
            vmem_limit_bytes=32 * 1024 * 1024),
    )(patches, wflat, scale_c, shift_c)

    return out.reshape(n, c_out, h_out, w_out)                       # stays NCHW


def discriminator_forward(x_nchw, layers):
    """Full Discriminator forward (NCHW in, NCHW out).

    layers: list of (weight (Cout,Cin,4,4), bias_or_None, bn_or_None, stride, slope_or_None)."""
    x = x_nchw
    for (w, b, bn, stride, slope) in layers:
        x = _conv_bn_act_layer(x, w, b, bn, stride, slope)
    return x


def discriminator_reference(x, layers):
    """Pure-JAX reference of the PyTorch forward (NCHW, eval-mode BatchNorm)."""
    def bcast(v):
        return v[None, :, None, None]

    for (w, b, bn, stride, slope) in layers:
        y = lax.conv_general_dilated(
            x, w, window_strides=(stride, stride), padding=[(1, 1), (1, 1)],
            dimension_numbers=("NCHW", "OIHW", "NCHW"))
        if b is not None:
            y = y + bcast(b)
        if bn is not None:
            gamma, beta, mean, var = bn
            y = (y - bcast(mean)) * lax.rsqrt(bcast(var) + EPS) * bcast(gamma) + bcast(beta)
        if slope is not None:
            y = jnp.where(y >= 0.0, y, slope * y)
        x = y
    return x


if __name__ == "__main__":
    N, IN_CH, H, W = 2, 3, 32, 32
    NDF, N_LAYERS = 8, 3
    SLOPE = 0.2

    # Layer configuration exactly as Discriminator.__init__ with norm_layer=nn.BatchNorm2d
    # (=> use_bias=False for the normalized convs).
    cfg = [(IN_CH, NDF, 2, True, False, SLOPE)]
    mult = 1
    for i in range(1, N_LAYERS):
        mult_prev, mult = mult, min(2 ** i, 8)
        cfg.append((NDF * mult_prev, NDF * mult, 2, False, True, SLOPE))
    mult_prev, mult = mult, min(2 ** N_LAYERS, 8)
    cfg.append((NDF * mult_prev, NDF * mult, 1, False, True, SLOPE))
    cfg.append((NDF * mult, 1, 1, True, False, None))

    key = jax.random.PRNGKey(0)
    key, kx = jax.random.split(key)
    x = jax.random.normal(kx, (N, IN_CH, H, W), dtype=jnp.float32)

    layers = []
    for (cin, cout, stride, use_bias, use_bn, slope) in cfg:
        key, kw, kb, k1, k2, k3, k4 = jax.random.split(key, 7)
        wgt = jax.random.normal(kw, (cout, cin, K4, K4), jnp.float32) / jnp.sqrt(K4 * K4 * cin)
        bias = 0.1 * jax.random.normal(kb, (cout,), jnp.float32) if use_bias else None
        if use_bn:
            bn = (1.0 + 0.1 * jax.random.normal(k1, (cout,), jnp.float32),   # gamma
                  0.1 * jax.random.normal(k2, (cout,), jnp.float32),         # beta
                  0.1 * jax.random.normal(k3, (cout,), jnp.float32),         # running_mean
                  0.5 + jax.random.uniform(k4, (cout,), jnp.float32))        # running_var
        else:
            bn = None
        layers.append((wgt, bias, bn, stride, slope))

    fwd = jax.jit(lambda inp: discriminator_forward(inp, layers))
    out = jax.block_until_ready(fwd(x))

    ref = discriminator_reference(x, layers)
    assert out.shape == ref.shape == (N, 1, 2, 2), (out.shape, ref.shape)
    assert jnp.allclose(out, ref, rtol=2e-3, atol=2e-3), (
        f"max abs diff = {jnp.max(jnp.abs(out - ref))}")

    print("KERNEL_OK")
</pallas_src>

<mosaic_0001>
module attributes {stable_mosaic.version = 11 : i64} {
  func.func @kernel(%arg0: i32, %arg1: memref<1x48x256xf32, #tpu.memory_space<vmem>>, %arg2: memref<8x48xf32, #tpu.memory_space<vmem>>, %arg3: memref<8x1xf32, #tpu.memory_space<vmem>>, %arg4: memref<8x1xf32, #tpu.memory_space<vmem>>, %arg5: memref<1x8x256xf32, #tpu.memory_space<vmem>>) attributes {dimension_semantics = [#tpu.dimension_semantics<parallel>], iteration_bounds = array<i64: 2>, scalar_prefetch = 0 : i64, scratch_operands = 0 : i64, tpu.core_type = #tpu.core_type<tc>, window_params = [{transform_indices = @transform_0, window_bounds = array<i64: 1, 48, 256>}, {pipeline_mode = #tpu.pipeline_mode<synchronous>, transform_indices = @transform_1, window_bounds = array<i64: 8, 48>}, {pipeline_mode = #tpu.pipeline_mode<synchronous>, transform_indices = @transform_2, window_bounds = array<i64: 8, 1>}, {pipeline_mode = #tpu.pipeline_mode<synchronous>, transform_indices = @transform_3, window_bounds = array<i64: 8, 1>}, {transform_indices = @transform_4, window_bounds = array<i64: 1, 8, 256>}]} {
    %c0 = arith.constant 0 : index
    %c0_0 = arith.constant 0 : index
    %0 = vector.load %arg2[%c0, %c0_0] : memref<8x48xf32, #tpu.memory_space<vmem>>, vector<8x48xf32>
    %c0_1 = arith.constant 0 : index
    %c0_2 = arith.constant 0 : index
    %c0_3 = arith.constant 0 : index
    %1 = vector.load %arg1[%c0_1, %c0_2, %c0_3] : memref<1x48x256xf32, #tpu.memory_space<vmem>>, vector<1x48x256xf32>
    %2 = vector.shape_cast %1 : vector<1x48x256xf32> to vector<48x256xf32>
    %cst = arith.constant dense<0.000000e+00> : vector<8x256xf32>
    %3 = tpu.matmul %0, %2, %cst {dimension_numbers = #tpu.dot_dimension_numbers<[1], [0], [0], [1], [0, 0, 1, 1], [], []>} : vector<8x48xf32>, vector<48x256xf32>, vector<8x256xf32> -> vector<8x256xf32>
    %c0_4 = arith.constant 0 : index
    %c0_5 = arith.constant 0 : index
    %4 = vector.load %arg3[%c0_4, %c0_5] : memref<8x1xf32, #tpu.memory_space<vmem>>, vector<8x1xf32>
    %5 = vector.broadcast %4 : vector<8x1xf32> to vector<8x256xf32>
    %6 = arith.mulf %3, %5 : vector<8x256xf32>
    %c0_6 = arith.constant 0 : index
    %c0_7 = arith.constant 0 : index
    %7 = vector.load %arg4[%c0_6, %c0_7] : memref<8x1xf32, #tpu.memory_space<vmem>>, vector<8x1xf32>
    %8 = vector.broadcast %7 : vector<8x1xf32> to vector<8x256xf32>
    %9 = arith.addf %6, %8 : vector<8x256xf32>
    %cst_8 = arith.constant 0.000000e+00 : f32
    %10 = vector.broadcast %cst_8 : f32 to vector<8x256xf32>
    %11 = arith.cmpf oge, %9, %10 : vector<8x256xf32>
    %cst_9 = arith.constant 2.000000e-01 : f32
    %12 = vector.broadcast %cst_9 : f32 to vector<8x256xf32>
    %13 = arith.mulf %12, %9 : vector<8x256xf32>
    %14 = arith.select %11, %9, %13 : vector<8x256xi1>, vector<8x256xf32>
    %c0_10 = arith.constant 0 : index
    %c0_11 = arith.constant 0 : index
    %c0_12 = arith.constant 0 : index
    %15 = vector.load %arg5[%c0_10, %c0_11, %c0_12] : memref<1x8x256xf32, #tpu.memory_space<vmem>>, vector<1x8x256xf32>
    %16 = vector.shape_cast %15 : vector<1x8x256xf32> to vector<8x256xf32>
    %17 = vector.shape_cast %14 : vector<8x256xf32> to vector<1x8x256xf32>
    tpu.vector_store %arg5[%c0_10, %c0_11, %c0_12], %17 {strides = array<i32>} : memref<1x8x256xf32, #tpu.memory_space<vmem>>, vector<1x8x256xf32>,
    return
  }
  func.func @transform_0(%arg0: i32) -> (i32, i32, i32) {
    %c0_i32 = arith.constant 0 : i32
    %c0_i32_0 = arith.constant 0 : i32
    %c0_i32_1 = arith.constant 0 : i32
    return %arg0, %c0_i32, %c0_i32_0 : i32, i32, i32
  }
  func.func @transform_1(%arg0: i32) -> (i32, i32) {
    %c0_i32 = arith.constant 0 : i32
    %c0_i32_0 = arith.constant 0 : i32
    %c0_i32_1 = arith.constant 0 : i32
    return %c0_i32, %c0_i32_0 : i32, i32
  }
  func.func @transform_2(%arg0: i32) -> (i32, i32) {
    %c0_i32 = arith.constant 0 : i32
    %c0_i32_0 = arith.constant 0 : i32
    %c0_i32_1 = arith.constant 0 : i32
    return %c0_i32, %c0_i32_0 : i32, i32
  }
  func.func @transform_3(%arg0: i32) -> (i32, i32) {
    %c0_i32 = arith.constant 0 : i32
    %c0_i32_0 = arith.constant 0 : i32
    %c0_i32_1 = arith.constant 0 : i32
    return %c0_i32, %c0_i32_0 : i32, i32
  }
  func.func @transform_4(%arg0: i32) -> (i32, i32, i32) {
    %c0_i32 = arith.constant 0 : i32
    %c0_i32_0 = arith.constant 0 : i32
    %c0_i32_1 = arith.constant 0 : i32
    return %arg0, %c0_i32, %c0_i32_0 : i32, i32, i32
  }
}

module attributes {stable_mosaic.version = 11 : i64} {
  func.func @kernel(%arg0: i32, %arg1: memref<1x128x64xf32, #tpu.memory_space<vmem>>, %arg2: memref<16x128xf32, #tpu.memory_space<vmem>>, %arg3: memref<16x1xf32, #tpu.memory_space<vmem>>, %arg4: memref<16x1xf32, #tpu.memory_space<vmem>>, %arg5: memref<1x16x64xf32, #tpu.memory_space<vmem>>) attributes {dimension_semantics = [#tpu.dimension_semantics<parallel>], iteration_bounds = array<i64: 2>, scalar_prefetch = 0 : i64, scratch_operands = 0 : i64, tpu.core_type = #tpu.core_type<tc>, window_params = [{transform_indices = @transform_0, window_bounds = array<i64: 1, 128, 64>}, {pipeline_mode = #tpu.pipeline_mode<synchronous>, transform_indices = @transform_1, window_bounds = array<i64: 16, 128>}, {pipeline_mode = #tpu.pipeline_mode<synchronous>, transform_indices = @transform_2, window_bounds = array<i64: 16, 1>}, {pipeline_mode = #tpu.pipeline_mode<synchronous>, transform_indices = @transform_3, window_bounds = array<i64: 16, 1>}, {transform_indices = @transform_4, window_bounds = array<i64: 1, 16, 64>}]} {
    %c0 = arith.constant 0 : index
    %c0_0 = arith.constant 0 : index
    %0 = vector.load %arg2[%c0, %c0_0] : memref<16x128xf32, #tpu.memory_space<vmem>>, vector<16x128xf32>
    %c0_1 = arith.constant 0 : index
    %c0_2 = arith.constant 0 : index
    %c0_3 = arith.constant 0 : index
    %1 = vector.load %arg1[%c0_1, %c0_2, %c0_3] : memref<1x128x64xf32, #tpu.memory_space<vmem>>, vector<1x128x64xf32>
    %2 = vector.shape_cast %1 : vector<1x128x64xf32> to vector<128x64xf32>
    %cst = arith.constant dense<0.000000e+00> : vector<16x64xf32>
    %3 = tpu.matmul %0, %2, %cst {dimension_numbers = #tpu.dot_dimension_numbers<[1], [0], [0], [1], [0, 0, 1, 1], [], []>} : vector<16x128xf32>, vector<128x64xf32>, vector<16x64xf32> -> vector<16x64xf32>
    %c0_4 = arith.constant 0 : index
    %c0_5 = arith.constant 0 : index
    %4 = vector.load %arg3[%c0_4, %c0_5] : memref<16x1xf32, #tpu.memory_space<vmem>>, vector<16x1xf32>
    %5 = vector.broadcast %4 : vector<16x1xf32> to vector<16x64xf32>
    %6 = arith.mulf %3, %5 : vector<16x64xf32>
    %c0_6 = arith.constant 0 : index
    %c0_7 = arith.constant 0 : index
    %7 = vector.load %arg4[%c0_6, %c0_7] : memref<16x1xf32, #tpu.memory_space<vmem>>, vector<16x1xf32>
    %8 = vector.broadcast %7 : vector<16x1xf32> to vector<16x64xf32>
    %9 = arith.addf %6, %8 : vector<16x64xf32>
    %cst_8 = arith.constant 0.000000e+00 : f32
    %10 = vector.broadcast %cst_8 : f32 to vector<16x64xf32>
    %11 = arith.cmpf oge, %9, %10 : vector<16x64xf32>
    %cst_9 = arith.constant 2.000000e-01 : f32
    %12 = vector.broadcast %cst_9 : f32 to vector<16x64xf32>
    %13 = arith.mulf %12, %9 : vector<16x64xf32>
    %14 = arith.select %11, %9, %13 : vector<16x64xi1>, vector<16x64xf32>
    %c0_10 = arith.constant 0 : index
    %c0_11 = arith.constant 0 : index
    %c0_12 = arith.constant 0 : index
    %15 = vector.load %arg5[%c0_10, %c0_11, %c0_12] : memref<1x16x64xf32, #tpu.memory_space<vmem>>, vector<1x16x64xf32>
    %16 = vector.shape_cast %15 : vector<1x16x64xf32> to vector<16x64xf32>
    %17 = vector.shape_cast %14 : vector<16x64xf32> to vector<1x16x64xf32>
    tpu.vector_store %arg5[%c0_10, %c0_11, %c0_12], %17 {strides = array<i32>} : memref<1x16x64xf32, #tpu.memory_space<vmem>>, vector<1x16x64xf32>,
    return
  }
  func.func @transform_0(%arg0: i32) -> (i32, i32, i32) {
    %c0_i32 = arith.constant 0 : i32
    %c0_i32_0 = arith.constant 0 : i32
    %c0_i32_1 = arith.constant 0 : i32
    return %arg0, %c0_i32, %c0_i32_0 : i32, i32, i32
  }
  func.func @transform_1(%arg0: i32) -> (i32, i32) {
    %c0_i32 = arith.constant 0 : i32
    %c0_i32_0 = arith.constant 0 : i32
    %c0_i32_1 = arith.constant 0 : i32
    return %c0_i32, %c0_i32_0 : i32, i32
  }
  func.func @transform_2(%arg0: i32) -> (i32, i32) {
    %c0_i32 = arith.constant 0 : i32
    %c0_i32_0 = arith.constant 0 : i32
    %c0_i32_1 = arith.constant 0 : i32
    return %c0_i32, %c0_i32_0 : i32, i32
  }
  func.func @transform_3(%arg0: i32) -> (i32, i32) {
    %c0_i32 = arith.constant 0 : i32
    %c0_i32_0 = arith.constant 0 : i32
    %c0_i32_1 = arith.constant 0 : i32
    return %c0_i32, %c0_i32_0 : i32, i32
  }
  func.func @transform_4(%arg0: i32) -> (i32, i32, i32) {
    %c0_i32 = arith.constant 0 : i32
    %c0_i32_0 = arith.constant 0 : i32
    %c0_i32_1 = arith.constant 0 : i32
    return %arg0, %c0_i32, %c0_i32_0 : i32, i32, i32
  }
}

module attributes {stable_mosaic.version = 11 : i64} {
  func.func @kernel(%arg0: i32, %arg1: memref<1x256x16xf32, #tpu.memory_space<vmem>>, %arg2: memref<32x256xf32, #tpu.memory_space<vmem>>, %arg3: memref<32x1xf32, #tpu.memory_space<vmem>>, %arg4: memref<32x1xf32, #tpu.memory_space<vmem>>, %arg5: memref<1x32x16xf32, #tpu.memory_space<vmem>>) attributes {dimension_semantics = [#tpu.dimension_semantics<parallel>], iteration_bounds = array<i64: 2>, scalar_prefetch = 0 : i64, scratch_operands = 0 : i64, tpu.core_type = #tpu.core_type<tc>, window_params = [{transform_indices = @transform_0, window_bounds = array<i64: 1, 256, 16>}, {pipeline_mode = #tpu.pipeline_mode<synchronous>, transform_indices = @transform_1, window_bounds = array<i64: 32, 256>}, {pipeline_mode = #tpu.pipeline_mode<synchronous>, transform_indices = @transform_2, window_bounds = array<i64: 32, 1>}, {pipeline_mode = #tpu.pipeline_mode<synchronous>, transform_indices = @transform_3, window_bounds = array<i64: 32, 1>}, {transform_indices = @transform_4, window_bounds = array<i64: 1, 32, 16>}]} {
    %c0 = arith.constant 0 : index
    %c0_0 = arith.constant 0 : index
    %0 = vector.load %arg2[%c0, %c0_0] : memref<32x256xf32, #tpu.memory_space<vmem>>, vector<32x256xf32>
    %c0_1 = arith.constant 0 : index
    %c0_2 = arith.constant 0 : index
    %c0_3 = arith.constant 0 : index
    %1 = vector.load %arg1[%c0_1, %c0_2, %c0_3] : memref<1x256x16xf32, #tpu.memory_space<vmem>>, vector<1x256x16xf32>
    %2 = vector.shape_cast %1 : vector<1x256x16xf32> to vector<256x16xf32>
    %cst = arith.constant dense<0.000000e+00> : vector<32x16xf32>
    %3 = tpu.matmul %0, %2, %cst {dimension_numbers = #tpu.dot_dimension_numbers<[1], [0], [0], [1], [0, 0, 1, 1], [], []>} : vector<32x256xf32>, vector<256x16xf32>, vector<32x16xf32> -> vector<32x16xf32>
    %c0_4 = arith.constant 0 : index
    %c0_5 = arith.constant 0 : index
    %4 = vector.load %arg3[%c0_4, %c0_5] : memref<32x1xf32, #tpu.memory_space<vmem>>, vector<32x1xf32>
    %5 = vector.broadcast %4 : vector<32x1xf32> to vector<32x16xf32>
    %6 = arith.mulf %3, %5 : vector<32x16xf32>
    %c0_6 = arith.constant 0 : index
    %c0_7 = arith.constant 0 : index
    %7 = vector.load %arg4[%c0_6, %c0_7] : memref<32x1xf32, #tpu.memory_space<vmem>>, vector<32x1xf32>
    %8 = vector.broadcast %7 : vector<32x1xf32> to vector<32x16xf32>
    %9 = arith.addf %6, %8 : vector<32x16xf32>
    %cst_8 = arith.constant 0.000000e+00 : f32
    %10 = vector.broadcast %cst_8 : f32 to vector<32x16xf32>
    %11 = arith.cmpf oge, %9, %10 : vector<32x16xf32>
    %cst_9 = arith.constant 2.000000e-01 : f32
    %12 = vector.broadcast %cst_9 : f32 to vector<32x16xf32>
    %13 = arith.mulf %12, %9 : vector<32x16xf32>
    %14 = arith.select %11, %9, %13 : vector<32x16xi1>, vector<32x16xf32>
    %c0_10 = arith.constant 0 : index
    %c0_11 = arith.constant 0 : index
    %c0_12 = arith.constant 0 : index
    %15 = vector.load %arg5[%c0_10, %c0_11, %c0_12] : memref<1x32x16xf32, #tpu.memory_space<vmem>>, vector<1x32x16xf32>
    %16 = vector.shape_cast %15 : vector<1x32x16xf32> to vector<32x16xf32>
    %17 = vector.shape_cast %14 : vector<32x16xf32> to vector<1x32x16xf32>
    tpu.vector_store %arg5[%c0_10, %c0_11, %c0_12], %17 {strides = array<i32>} : memref<1x32x16xf32, #tpu.memory_space<vmem>>, vector<1x32x16xf32>,
    return
  }
  func.func @transform_0(%arg0: i32) -> (i32, i32, i32) {
    %c0_i32 = arith.constant 0 : i32
    %c0_i32_0 = arith.constant 0 : i32
    %c0_i32_1 = arith.constant 0 : i32
    return %arg0, %c0_i32, %c0_i32_0 : i32, i32, i32
  }
  func.func @transform_1(%arg0: i32) -> (i32, i32) {
    %c0_i32 = arith.constant 0 : i32
    %c0_i32_0 = arith.constant 0 : i32
    %c0_i32_1 = arith.constant 0 : i32
    return %c0_i32, %c0_i32_0 : i32, i32
  }
  func.func @transform_2(%arg0: i32) -> (i32, i32) {
    %c0_i32 = arith.constant 0 : i32
    %c0_i32_0 = arith.constant 0 : i32
    %c0_i32_1 = arith.constant 0 : i32
    return %c0_i32, %c0_i32_0 : i32, i32
  }
  func.func @transform_3(%arg0: i32) -> (i32, i32) {
    %c0_i32 = arith.constant 0 : i32
    %c0_i32_0 = arith.constant 0 : i32
    %c0_i32_1 = arith.constant 0 : i32
    return %c0_i32, %c0_i32_0 : i32, i32
  }
  func.func @transform_4(%arg0: i32) -> (i32, i32, i32) {
    %c0_i32 = arith.constant 0 : i32
    %c0_i32_0 = arith.constant 0 : i32
    %c0_i32_1 = arith.constant 0 : i32
    return %arg0, %c0_i32, %c0_i32_0 : i32, i32, i32
  }
}

module attributes {stable_mosaic.version = 11 : i64} {
  func.func @kernel(%arg0: i32, %arg1: memref<1x512x9xf32, #tpu.memory_space<vmem>>, %arg2: memref<64x512xf32, #tpu.memory_space<vmem>>, %arg3: memref<64x1xf32, #tpu.memory_space<vmem>>, %arg4: memref<64x1xf32, #tpu.memory_space<vmem>>, %arg5: memref<1x64x9xf32, #tpu.memory_space<vmem>>) attributes {dimension_semantics = [#tpu.dimension_semantics<parallel>], iteration_bounds = array<i64: 2>, scalar_prefetch = 0 : i64, scratch_operands = 0 : i64, tpu.core_type = #tpu.core_type<tc>, window_params = [{transform_indices = @transform_0, window_bounds = array<i64: 1, 512, 9>}, {pipeline_mode = #tpu.pipeline_mode<synchronous>, transform_indices = @transform_1, window_bounds = array<i64: 64, 512>}, {pipeline_mode = #tpu.pipeline_mode<synchronous>, transform_indices = @transform_2, window_bounds = array<i64: 64, 1>}, {pipeline_mode = #tpu.pipeline_mode<synchronous>, transform_indices = @transform_3, window_bounds = array<i64: 64, 1>}, {transform_indices = @transform_4, window_bounds = array<i64: 1, 64, 9>}]} {
    %c0 = arith.constant 0 : index
    %c0_0 = arith.constant 0 : index
    %0 = vector.load %arg2[%c0, %c0_0] : memref<64x512xf32, #tpu.memory_space<vmem>>, vector<64x512xf32>
    %c0_1 = arith.constant 0 : index
    %c0_2 = arith.constant 0 : index
    %c0_3 = arith.constant 0 : index
    %1 = vector.load %arg1[%c0_1, %c0_2, %c0_3] : memref<1x512x9xf32, #tpu.memory_space<vmem>>, vector<1x512x9xf32>
    %2 = vector.shape_cast %1 : vector<1x512x9xf32> to vector<512x9xf32>
    %cst = arith.constant dense<0.000000e+00> : vector<64x9xf32>
    %3 = tpu.matmul %0, %2, %cst {dimension_numbers = #tpu.dot_dimension_numbers<[1], [0], [0], [1], [0, 0, 1, 1], [], []>} : vector<64x512xf32>, vector<512x9xf32>, vector<64x9xf32> -> vector<64x9xf32>
    %c0_4 = arith.constant 0 : index
    %c0_5 = arith.constant 0 : index
    %4 = vector.load %arg3[%c0_4, %c0_5] : memref<64x1xf32, #tpu.memory_space<vmem>>, vector<64x1xf32>
    %5 = vector.broadcast %4 : vector<64x1xf32> to vector<64x9xf32>
    %6 = arith.mulf %3, %5 : vector<64x9xf32>
    %c0_6 = arith.constant 0 : index
    %c0_7 = arith.constant 0 : index
    %7 = vector.load %arg4[%c0_6, %c0_7] : memref<64x1xf32, #tpu.memory_space<vmem>>, vector<64x1xf32>
    %8 = vector.broadcast %7 : vector<64x1xf32> to vector<64x9xf32>
    %9 = arith.addf %6, %8 : vector<64x9xf32>
    %cst_8 = arith.constant 0.000000e+00 : f32
    %10 = vector.broadcast %cst_8 : f32 to vector<64x9xf32>
    %11 = arith.cmpf oge, %9, %10 : vector<64x9xf32>
    %cst_9 = arith.constant 2.000000e-01 : f32
    %12 = vector.broadcast %cst_9 : f32 to vector<64x9xf32>
    %13 = arith.mulf %12, %9 : vector<64x9xf32>
    %14 = arith.select %11, %9, %13 : vector<64x9xi1>, vector<64x9xf32>
    %c0_10 = arith.constant 0 : index
    %c0_11 = arith.constant 0 : index
    %c0_12 = arith.constant 0 : index
    %15 = vector.load %arg5[%c0_10, %c0_11, %c0_12] : memref<1x64x9xf32, #tpu.memory_space<vmem>>, vector<1x64x9xf32>
    %16 = vector.shape_cast %15 : vector<1x64x9xf32> to vector<64x9xf32>
    %17 = vector.shape_cast %14 : vector<64x9xf32> to vector<1x64x9xf32>
    tpu.vector_store %arg5[%c0_10, %c0_11, %c0_12], %17 {strides = array<i32>} : memref<1x64x9xf32, #tpu.memory_space<vmem>>, vector<1x64x9xf32>,
    return
  }
  func.func @transform_0(%arg0: i32) -> (i32, i32, i32) {
    %c0_i32 = arith.constant 0 : i32
    %c0_i32_0 = arith.constant 0 : i32
    %c0_i32_1 = arith.constant 0 : i32
    return %arg0, %c0_i32, %c0_i32_0 : i32, i32, i32
  }
  func.func @transform_1(%arg0: i32) -> (i32, i32) {
    %c0_i32 = arith.constant 0 : i32
    %c0_i32_0 = arith.constant 0 : i32
    %c0_i32_1 = arith.constant 0 : i32
    return %c0_i32, %c0_i32_0 : i32, i32
  }
  func.func @transform_2(%arg0: i32) -> (i32, i32) {
    %c0_i32 = arith.constant 0 : i32
    %c0_i32_0 = arith.constant 0 : i32
    %c0_i32_1 = arith.constant 0 : i32
    return %c0_i32, %c0_i32_0 : i32, i32
  }
  func.func @transform_3(%arg0: i32) -> (i32, i32) {
    %c0_i32 = arith.constant 0 : i32
    %c0_i32_0 = arith.constant 0 : i32
    %c0_i32_1 = arith.constant 0 : i32
    return %c0_i32, %c0_i32_0 : i32, i32
  }
  func.func @transform_4(%arg0: i32) -> (i32, i32, i32) {
    %c0_i32 = arith.constant 0 : i32
    %c0_i32_0 = arith.constant 0 : i32
    %c0_i32_1 = arith.constant 0 : i32
    return %arg0, %c0_i32, %c0_i32_0 : i32, i32, i32
  }
}

module attributes {stable_mosaic.version = 11 : i64} {
  func.func @kernel(%arg0: i32, %arg1: memref<1x1024x4xf32, #tpu.memory_space<vmem>>, %arg2: memref<1x1024xf32, #tpu.memory_space<vmem>>, %arg3: memref<1x1xf32, #tpu.memory_space<vmem>>, %arg4: memref<1x1xf32, #tpu.memory_space<vmem>>, %arg5: memref<1x1x4xf32, #tpu.memory_space<vmem>>) attributes {dimension_semantics = [#tpu.dimension_semantics<parallel>], iteration_bounds = array<i64: 2>, scalar_prefetch = 0 : i64, scratch_operands = 0 : i64, tpu.core_type = #tpu.core_type<tc>, window_params = [{transform_indices = @transform_0, window_bounds = array<i64: 1, 1024, 4>}, {pipeline_mode = #tpu.pipeline_mode<synchronous>, transform_indices = @transform_1, window_bounds = array<i64: 1, 1024>}, {pipeline_mode = #tpu.pipeline_mode<synchronous>, transform_indices = @transform_2, window_bounds = array<i64: 1, 1>}, {pipeline_mode = #tpu.pipeline_mode<synchronous>, transform_indices = @transform_3, window_bounds = array<i64: 1, 1>}, {transform_indices = @transform_4, window_bounds = array<i64: 1, 1, 4>}]} {
    %c0 = arith.constant 0 : index
    %c0_0 = arith.constant 0 : index
    %0 = vector.load %arg2[%c0, %c0_0] : memref<1x1024xf32, #tpu.memory_space<vmem>>, vector<1x1024xf32>
    %c0_1 = arith.constant 0 : index
    %c0_2 = arith.constant 0 : index
    %c0_3 = arith.constant 0 : index
    %1 = vector.load %arg1[%c0_1, %c0_2, %c0_3] : memref<1x1024x4xf32, #tpu.memory_space<vmem>>, vector<1x1024x4xf32>
    %2 = vector.shape_cast %1 : vector<1x1024x4xf32> to vector<1024x4xf32>
    %cst = arith.constant dense<0.000000e+00> : vector<1x4xf32>
    %3 = tpu.matmul %0, %2, %cst {dimension_numbers = #tpu.dot_dimension_numbers<[1], [0], [0], [1], [0, 0, 1, 1], [], []>} : vector<1x1024xf32>, vector<1024x4xf32>, vector<1x4xf32> -> vector<1x4xf32>
    %c0_4 = arith.constant 0 : index
    %c0_5 = arith.constant 0 : index
    %4 = vector.load %arg3[%c0_4, %c0_5] : memref<1x1xf32, #tpu.memory_space<vmem>>, vector<1x1xf32>
    %5 = vector.broadcast %4 : vector<1x1xf32> to vector<1x4xf32>
    %6 = arith.mulf %3, %5 : vector<1x4xf32>
    %c0_6 = arith.constant 0 : index
    %c0_7 = arith.constant 0 : index
    %7 = vector.load %arg4[%c0_6, %c0_7] : memref<1x1xf32, #tpu.memory_space<vmem>>, vector<1x1xf32>
    %8 = vector.broadcast %7 : vector<1x1xf32> to vector<1x4xf32>
    %9 = arith.addf %6, %8 : vector<1x4xf32>
    %c0_8 = arith.constant 0 : index
    %c0_9 = arith.constant 0 : index
    %c0_10 = arith.constant 0 : index
    %10 = vector.load %arg5[%c0_8, %c0_9, %c0_10] : memref<1x1x4xf32, #tpu.memory_space<vmem>>, vector<1x1x4xf32>
    %11 = vector.shape_cast %10 : vector<1x1x4xf32> to vector<1x4xf32>
    %12 = vector.shape_cast %9 : vector<1x4xf32> to vector<1x1x4xf32>
    tpu.vector_store %arg5[%c0_8, %c0_9, %c0_10], %12 {strides = array<i32>} : memref<1x1x4xf32, #tpu.memory_space<vmem>>, vector<1x1x4xf32>,
    return
  }
  func.func @transform_0(%arg0: i32) -> (i32, i32, i32) {
    %c0_i32 = arith.constant 0 : i32
    %c0_i32_0 = arith.constant 0 : i32
    %c0_i32_1 = arith.constant 0 : i32
    return %arg0, %c0_i32, %c0_i32_0 : i32, i32, i32
  }
  func.func @transform_1(%arg0: i32) -> (i32, i32) {
    %c0_i32 = arith.constant 0 : i32
    %c0_i32_0 = arith.constant 0 : i32
    %c0_i32_1 = arith.constant 0 : i32
    return %c0_i32, %c0_i32_0 : i32, i32
  }
  func.func @transform_2(%arg0: i32) -> (i32, i32) {
    %c0_i32 = arith.constant 0 : i32
    %c0_i32_0 = arith.constant 0 : i32
    %c0_i32_1 = arith.constant 0 : i32
    return %c0_i32, %c0_i32_0 : i32, i32
  }
  func.func @transform_3(%arg0: i32) -> (i32, i32) {
    %c0_i32 = arith.constant 0 : i32
    %c0_i32_0 = arith.constant 0 : i32
    %c0_i32_1 = arith.constant 0 : i32
    return %c0_i32, %c0_i32_0 : i32, i32
  }
  func.func @transform_4(%arg0: i32) -> (i32, i32, i32) {
    %c0_i32 = arith.constant 0 : i32
    %c0_i32_0 = arith.constant 0 : i32
    %c0_i32_1 = arith.constant 0 : i32
    return %arg0, %c0_i32, %c0_i32_0 : i32, i32, i32
  }
}

</mosaic_0001>

<llo_original>
// kernel: _lambda_.5
$region0: #{_lambda_.5}
  #allocation0 [shape = 'u32[]', space=smem, size = 0x4, offset = 0x4, fixed_abs, tag = 'smem constant byte address 0x4 - core index']
  #allocation1 [shape = 'u32[144,128]{1,0:T(1,128)}', space=vmem, size = 0x12000, scoped, tag = 'internal scratch']
  %s0 = inlined_call_operand.vmem [shape: f32[2,48,256], index: 0, kind: input, shape index: {}]
  %s1 = inlined_call_operand.vmem [shape: f32[8,48], index: 1, kind: input, shape index: {}]
  %s2 = inlined_call_operand.vmem [shape: f32[8,1], index: 2, kind: input, shape index: {}]
  %s3 = inlined_call_operand.vmem [shape: f32[8,1], index: 3, kind: input, shape index: {}]
  %s4 = inlined_call_operand.vmem [shape: f32[2,8,256], index: 4, kind: output, shape index: {}]
  %s5 = sld [smem:[#allocation0]]
  $region49: #{_lambda_.5} parent=0
    _
  %s7 = ssub.s32 1, %s5
  %s8 = scalar_select 0, %s7, %s5
  loop: start=0, step=1, limit=4
  $region2: #{_lambda_.5} parent=0 // loop_pre_header
    _
  $region3: #{_lambda_.5} parent=0 // loop_header
    %s10 = sphi 0, %s14
    %p11 = scmp.ge.s32.totalorder %s10, 4
    %s20 = sphi 0, %s22
    %s23 = sphi 0, %s20
    %s24 = sphi 0, %s23
    %s40 = sphi 0, %s24
    %s44 = sphi 0, %s44
    %s46 = sphi 0, %s44
    %s47 = sphi 0, %s46
    %s61 = sphi 0, %s47
    %s65 = sphi 0, %s65
    %s67 = sphi 0, %s65
    %s68 = sphi 0, %s67
    %s82 = sphi 0, %s68
    %s86 = sphi 0, %s86
    %s88 = sphi 0, %s86
    %s89 = sphi 0, %s88
    %s103 = sphi 0, %s89
    %s109 = sphi 0, %s111
    %s112 = sphi 0, %s109
    %s113 = sphi 0, %s112
    %s129 = sphi 0, %s113
  $region4: #{_lambda_.5} parent=0 // loop_header_branch
    %13 = sbr.rel (%p11) target = $region8
  $region5: #{_lambda_.5} parent=0 // loop_body
    %s15 = ssub.s32 %s10, 1
    %s16 = ssub.s32 %s10, 2
    %s17 = sadd.s32 %s10, 1
    %s18 = ssub.s32 %s10, %s17
    %p19 = scmp.eq.s32.totalorder %s18, 0
    %s21 = sadd.s32 %s20, 1
    %s22 = scalar_select %p19, %s20, %s21
    %p25 = pneg %p19
    %p26 = scmp.eq.s32.totalorder %s10, 1
    %p27 = por %p25, %p26
    %p28 = scmp.ne.s32.totalorder %s20, %s23
    %p29 = scmp.eq.s32.totalorder %s10, 0
    %p30 = por %p28, %p29
    %p31 = scmp.ne.s32.totalorder %s20, %s23
    %p32 = scmp.eq.s32.totalorder %s15, 1
    %p33 = por %p31, %p32
    %p34 = scmp.ne.s32.totalorder %s23, %s24
    %p35 = scmp.eq.s32.totalorder %s15, 0
    %p36 = por %p34, %p35
    %p37 = scmp.ne.s32.totalorder %s23, %s24
    %p38 = scmp.eq.s32.totalorder %s16, 1
    %p39 = por %p37, %p38
    %p41 = scmp.ne.s32.totalorder %s24, %s40
    %p42 = scmp.eq.s32.totalorder %s16, 0
    %p43 = por %p41, %p42
    %s45 = sadd.s32 %s44, 1
    %p48 = scmp.eq.s32.totalorder %s10, 1
    %p49 = scmp.ne.s32.totalorder %s44, %s46
    %p50 = scmp.eq.s32.totalorder %s10, 0
    %p51 = por %p49, %p50
    %p52 = scmp.ne.s32.totalorder %s44, %s46
    %p53 = scmp.eq.s32.totalorder %s15, 1
    %p54 = por %p52, %p53
    %p55 = scmp.ne.s32.totalorder %s46, %s47
    %p56 = scmp.eq.s32.totalorder %s15, 0
    %p57 = por %p55, %p56
    %p58 = scmp.ne.s32.totalorder %s46, %s47
    %p59 = scmp.eq.s32.totalorder %s16, 1
    %p60 = por %p58, %p59
    %p62 = scmp.ne.s32.totalorder %s47, %s61
    %p63 = scmp.eq.s32.totalorder %s16, 0
    %p64 = por %p62, %p63
    %s66 = sadd.s32 %s65, 1
    %p69 = scmp.eq.s32.totalorder %s10, 1
    %p70 = scmp.ne.s32.totalorder %s65, %s67
    %p71 = scmp.eq.s32.totalorder %s10, 0
    %p72 = por %p70, %p71
    %p73 = scmp.ne.s32.totalorder %s65, %s67
    %p74 = scmp.eq.s32.totalorder %s15, 1
    %p75 = por %p73, %p74
    %p76 = scmp.ne.s32.totalorder %s67, %s68
    %p77 = scmp.eq.s32.totalorder %s15, 0
    %p78 = por %p76, %p77
    %p79 = scmp.ne.s32.totalorder %s67, %s68
    %p80 = scmp.eq.s32.totalorder %s16, 1
    %p81 = por %p79, %p80
    %p83 = scmp.ne.s32.totalorder %s68, %s82
    %p84 = scmp.eq.s32.totalorder %s16, 0
    %p85 = por %p83, %p84
    %s87 = sadd.s32 %s86, 1
    %p90 = scmp.eq.s32.totalorder %s10, 1
    %p91 = scmp.ne.s32.totalorder %s86, %s88
    %p92 = scmp.eq.s32.totalorder %s10, 0
    %p93 = por %p91, %p92
    %p94 = scmp.ne.s32.totalorder %s86, %s88
    %p95 = scmp.eq.s32.totalorder %s15, 1
    %p96 = por %p94, %p95
    %p97 = scmp.ne.s32.totalorder %s88, %s89
    %p98 = scmp.eq.s32.totalorder %s15, 0
    %p99 = por %p97, %p98
    %p100 = scmp.ne.s32.totalorder %s88, %s89
    %p101 = scmp.eq.s32.totalorder %s16, 1
    %p102 = por %p100, %p101
    %p104 = scmp.ne.s32.totalorder %s89, %s103
    %p105 = scmp.eq.s32.totalorder %s16, 0
    %p106 = por %p104, %p105
    %s107 = ssub.s32 %s10, %s17
    %p108 = scmp.eq.s32.totalorder %s107, 0
    %s110 = sadd.s32 %s109, 1
    %s111 = scalar_select %p108, %s109, %s110
    %p114 = pneg %p108
    %p115 = scmp.eq.s32.totalorder %s10, 1
    %p116 = por %p114, %p115
    %p117 = scmp.ne.s32.totalorder %s109, %s112
    %p118 = scmp.eq.s32.totalorder %s10, 0
    %p119 = por %p117, %p118
    %p120 = scmp.ne.s32.totalorder %s109, %s112
    %p121 = scmp.eq.s32.totalorder %s15, 1
    %p122 = por %p120, %p121
    %p123 = scmp.ne.s32.totalorder %s112, %s113
    %p124 = scmp.eq.s32.totalorder %s15, 0
    %p125 = por %p123, %p124
    %p126 = scmp.ne.s32.totalorder %s112, %s113
    %p127 = scmp.eq.s32.totalorder %s16, 1
    %p128 = por %p126, %p127
    %p130 = scmp.ne.s32.totalorder %s113, %s129
    %p131 = scmp.eq.s32.totalorder %s16, 0
    %p132 = por %p130, %p131
    %p133 = scmp.le.s32.totalorder 1, %s10
    %p134 = scmp.lt.s32.totalorder %s10, 3
    %p135 = pnand %p133, %p134
    %p136 = pneg %p135
    // Predicated region
    $region9: #{_lambda_.5} parent=5 // pred_check
      _
    $region10: #{_lambda_.5} parent=5 // pred_check_branch
      %138 = sbr.rel (%p135) target = $region12
    $region11: #{_lambda_.5} parent=5 // pred_region
      %s139 = ssub.s32 %s10, 1
      // Predicated region
      $region13: #{_lambda_.5} parent=11 // pred_check
        %p140 = pneg %p57
      $region14: #{_lambda_.5} parent=11 // pred_check_branch
        %142 = sbr.rel (%p140) target = $region16
      $region15: #{_lambda_.5} parent=11 // pred_region
        _
      $region16: #{_lambda_.5} parent=11 // pred_fallthru
        _
      // Predicated region
      $region17: #{_lambda_.5} parent=11 // pred_check
        %p143 = pneg %p78
      $region18: #{_lambda_.5} parent=11 // pred_check_branch
        %145 = sbr.rel (%p143) target = $region20
      $region19: #{_lambda_.5} parent=11 // pred_region
        _
      $region20: #{_lambda_.5} parent=11 // pred_fallthru
        _
      // Predicated region
      $region21: #{_lambda_.5} parent=11 // pred_check
        %p146 = pneg %p99
      $region22: #{_lambda_.5} parent=11 // pred_check_branch
        %148 = sbr.rel (%p146) target = $region24
      $region23: #{_lambda_.5} parent=11 // pred_region
        _
      $region24: #{_lambda_.5} parent=11 // pred_fallthru
        _
    $region12: #{_lambda_.5} parent=5 // pred_fallthru
      _
    %p149 = scmp.lt.s32.totalorder %s10, 2
    // Predicated region
    $region25: #{_lambda_.5} parent=5 // pred_check
      %p150 = pneg %p149
    $region26: #{_lambda_.5} parent=5 // pred_check_branch
      %152 = sbr.rel (%p150) target = $region28
    $region27: #{_lambda_.5} parent=5 // pred_region
      // Predicated region
      $region29: #{_lambda_.5} parent=27 // pred_check
        %p153 = pneg %p30
      $region30: #{_lambda_.5} parent=27 // pred_check_branch
        %155 = sbr.rel (%p153) target = $region32
      $region31: #{_lambda_.5} parent=27 // pred_region
        %p156 = scmp.lt.s32.totalorder %s10, 1
        %s157 = scalar_select %p156, %s10, 1
        %s158 = smul.addr %s157, 12
        %s159 = smul.addr %s158, 8
        %s160 = scalar_lea.vmem %s0, %s159
      $region32: #{_lambda_.5} parent=27 // pred_fallthru
        _
    $region28: #{_lambda_.5} parent=5 // pred_fallthru
      _
    %p161 = scmp.le.s32.totalorder 1, %s10
    %p162 = scmp.lt.s32.totalorder %s10, 3
    %p163 = pnand %p161, %p162
    %p164 = pneg %p163
    // Predicated region
    $region33: #{_lambda_.5} parent=5 // pred_check
      _
    $region34: #{_lambda_.5} parent=5 // pred_check_branch
      %166 = sbr.rel (%p163) target = $region36
    $region35: #{_lambda_.5} parent=5 // pred_region
      %s167 = ssub.s32 %s10, 1
      %p168 = scmp.lt.s32.totalorder %s15, 1
      %s169 = scalar_select %p168, %s15, 1
      %s170 = smul.addr %s169, 12
      %s171 = smul.addr %s170, 8
      %s172 = scalar_lea.vmem %s0, %s171
      %p173 = pneg %p36
      %p174 = pneg %p33
      %p175 = pneg %p57
      %p176 = pneg %p54
      %p177 = pneg %p78
      %p178 = pneg %p75
      %p179 = pneg %p99
      %p180 = pneg %p96
      %p181 = pneg %p125
      %p182 = pneg %p122
      %p183 = scmp.lt.s32.totalorder %s15, 1
      %s184 = scalar_select %p183, %s15, 1
      %s185 = smul.addr %s184, 2
      %s186 = smul.addr %s185, 8
      %s187 = scalar_lea.vmem %s4, %s186
      %p188 = scmp.lt.s32.totalorder %s15, 1
      %s189 = scalar_select %p188, %s15, 1
      %s190 = smul.addr %s189, 12
      %s191 = smul.addr %s190, 8
      %s192 = scalar_lea.vmem %s0, %s191
      %p193 = scmp.lt.s32.totalorder %s15, 1
      %s194 = scalar_select %p193, %s15, 1
      %s195 = smul.addr %s194, 2
      %s196 = smul.addr %s195, 8
      %s197 = scalar_lea.vmem %s4, %s196
      %v198 = vld [vmem:[%s1] sm:$0xff]
      %v199 = vld [vmem:[%s192] sm:$0xff]
      %v200 = vld [vmem:[%s192 + $0x8] sm:$0xff]
      %v201 = vld [vmem:[%s192 + $0x10] sm:$0xff]
      %v202 = vld [vmem:[%s192 + $0x18] sm:$0xff]
      %v203 = vld [vmem:[%s192 + $0x20] sm:$0xff]
      %v204 = vld [vmem:[%s192 + $0x28] sm:$0xff]
      %v205 = vld [vmem:[%s192 + $0x30] sm:$0xff]
      %v206 = vld [vmem:[%s192 + $0x38] sm:$0xff]
      %v207 = vld [vmem:[%s192 + $0x40] sm:$0xff]
      %v208 = vld [vmem:[%s192 + $0x48] sm:$0xff]
      %v209 = vld [vmem:[%s192 + $0x50] sm:$0xff]
      %v210 = vld [vmem:[%s192 + $0x58] sm:$0xff]
      %vm211 = vcmask 392192
      %v213 = vsel %vm211, %v198, 0
      %215 = vmatprep.subr.mxu0 0.0
      %216 = vmatpush1.msra.mxu0 0.0
      %217 = vmatprep.subr.mxu0 0.0
      %218 = vmatpush1.msra.mxu0 0.0
      %219 = vmatprep.subr.mxu0 0.0
      %220 = vmatpush1.msra.mxu0 0.0
      %221 = vmatprep.subr.mxu0 0.0
      %222 = vmatpush1.msra.mxu0 0.0
      %223 = vmatprep.subr.mxu0 0.0
      %224 = vmatpush1.msra.mxu0 0.0
      %225 = vmatprep.subr.mxu0 0.0
      %226 = vmatpush1.msra.mxu0 0.0
      %227 = vmatprep.subr.mxu0 0.0
      %228 = vmatpush1.msra.mxu0 0.0
      %229 = vmatprep.subr.mxu0 0.0
      %230 = vmatpush1.msra.mxu0 0.0
      %231 = vmatprep.subr.mxu0 0.0
      %232 = vmatpush1.msra.mxu0 0.0
      %233 = vmatprep.subr.mxu0 0.0
      %234 = vmatpush1.msra.mxu0 0.0
      %235 = vmatprep.subr.mxu0 %v210
      %236 = vmatpush1.msra.mxu0 %v209
      %237 = vmatprep.subr.mxu0 %v208
      %238 = vmatpush1.msra.mxu0 %v207
      %239 = vmatprep.subr.mxu0 %v206
      %240 = vmatpush1.msra.mxu0 %v205
      %241 = vmatprep.subr.mxu0 %v204
      %242 = vmatpush1.msra.mxu0 %v203
      %243 = vmatprep.subr.mxu0 %v202
      %244 = vmatpush1.msra.mxu0 %v201
      %245 = vmatprep.subr.mxu0 %v200
      %246 = vmatpush1.msra.mxu0 %v199
      %247 = vmatprep.subr.mxu0 0.0
      %248 = vmatpush2.msra.mxu0 0.0
      %249 = vmatprep.subr.mxu0 0.0
      %250 = vmatpush2.msra.mxu0 0.0
      %251 = vmatprep.subr.mxu0 0.0
      %252 = vmatpush2.msra.mxu0 0.0
      %253 = vmatprep.subr.mxu0 0.0
      %254 = vmatpush2.msra.mxu0 0.0
      %255 = vmatprep.subr.mxu0 0.0
      %256 = vmatpush2.msra.mxu0 0.0
      %257 = vmatprep.subr.mxu0 0.0
      %258 = vmatpush2.msra.mxu0 0.0
      %259 = vmatprep.subr.mxu0 0.0
      %260 = vmatpush2.msra.mxu0 0.0
      %261 = vmatprep.subr.mxu0 0.0
      %262 = vmatpush2.msra.mxu0 0.0
      %263 = vmatprep.subr.mxu0 0.0
      %264 = vmatpush2.msra.mxu0 0.0
      %265 = vmatprep.subr.mxu0 0.0
      %266 = vmatpush2.msra.mxu0 0.0
      %267 = vmatprep.subr.mxu0 0.0
      %268 = vmatpush2.msra.mxu0 0.0
      %269 = vmatprep.subr.mxu0 0.0
      %270 = vmatpush2.msra.mxu0 0.0
      %271 = vmatprep.subr.mxu0 0.0
      %272 = vmatpush2.msra.mxu0 0.0
      %273 = vmatprep.subr.mxu0 0.0
      %274 = vmatpush2.msra.mxu0 0.0
      %275 = vmatprep.subr.mxu0 0.0
      %276 = vmatpush2.msra.mxu0 0.0
      %277 = vmatprep.subr.mxu0 0.0
      %278 = vmatpush2.msra.mxu0 0.0
      %279 = vmatprep.mubr.f32.mxu0 0.0
      %280 = vmatmul.mubr.f32.gmra.mxu0 %v213
      %v281 = vpop.f32.mrf.mxu0
      %v282 = vadd.f32 0.0, %v281
      %v283 = vpop.f32.mrf.mxu0
      %v284 = vadd.f32 0.0, %v283
      %285 = vdwg.mxu0
      %v286 = vld [vmem:[%s2] sm:$0xff]
      %288 = vset.pattern.permute.xlu0 0
      %289 = vperm.xlu0 %288, %v286
      %v290 = vpop.permute.xlu0 %289
      %v292 = vmul.f32 %v282, %v290
      %v293 = vmul.f32 %v284, %v290
      %v294 = vld [vmem:[%s3] sm:$0xff]
      %296 = vset.pattern.permute.xlu0 0
      %297 = vperm.xlu0 %296, %v294
      %v298 = vpop.permute.xlu0 %297
      %v300 = vadd.f32 %v292, %v298
      %v301 = vadd.f32 %v293, %v298
      %vm302 = vcmp.ge.f32.partialorder %v300, 0.0
      %vm303 = vcmp.ge.f32.partialorder %v301, 0.0
      %v304 = vmul.f32 %v300, 0.2
      %v305 = vmul.f32 %v301, 0.2
      %v306 = vsel %vm302, %v300, %v304
      %v307 = vsel %vm303, %v301, %v305
      %308 = vst [vmem:[%s197] sm:$0xff] %v306
      %309 = vst [vmem:[%s197 + $0x8] sm:$0xff] %v307
      %p310 = scmp.lt.s32.totalorder %s15, 1
      %s311 = scalar_select %p310, %s15, 1
      %s312 = smul.addr %s311, 2
      %s313 = smul.addr %s312, 8
      %s314 = scalar_lea.vmem %s4, %s313
      // Predicated region
      $region37: #{_lambda_.5} parent=35 // pred_check
        %p315 = pneg %p122
      $region38: #{_lambda_.5} parent=35 // pred_check_branch
        %317 = sbr.rel (%p315) target = $region40
      $region39: #{_lambda_.5} parent=35 // pred_region
        _
      $region40: #{_lambda_.5} parent=35 // pred_fallthru
        _
    $region36: #{_lambda_.5} parent=5 // pred_fallthru
      _
    %p318 = scmp.le.s32.totalorder 2, %s10
    // Predicated region
    $region41: #{_lambda_.5} parent=5 // pred_check
      %p319 = pneg %p318
    $region42: #{_lambda_.5} parent=5 // pred_check_branch
      %321 = sbr.rel (%p319) target = $region44
    $region43: #{_lambda_.5} parent=5 // pred_region
      %s322 = ssub.s32 %s10, 2
      // Predicated region
      $region45: #{_lambda_.5} parent=43 // pred_check
        %p323 = pneg %p128
      $region46: #{_lambda_.5} parent=43 // pred_check_branch
        %325 = sbr.rel (%p323) target = $region48
      $region47: #{_lambda_.5} parent=43 // pred_region
        %p326 = scmp.lt.s32.totalorder %s16, 1
        %s327 = scalar_select %p326, %s16, 1
        %s328 = smul.addr %s327, 2
        %s329 = smul.addr %s328, 8
        %s330 = scalar_lea.vmem %s4, %s329
      $region48: #{_lambda_.5} parent=43 // pred_fallthru
        _
    $region44: #{_lambda_.5} parent=5 // pred_fallthru
      _
  $region6: #{_lambda_.5} parent=0 // loop_footer
    %s14 = sadd.s32 1, %s10
  $region7: #{_lambda_.5} parent=0 // loop_footer_branch
    %9 = sbr.rel target = $region3
  $region8: #{_lambda_.5} parent=0 // loop_exit
    _

// kernel: _lambda_.6
$region0: #{_lambda_.6}
  #allocation0 [shape = 'u32[]', space=smem, size = 0x4, offset = 0x4, fixed_abs, tag = 'smem constant byte address 0x4 - core index']
  #allocation1 [shape = 'u32[144,128]{1,0:T(1,128)}', space=vmem, size = 0x12000, scoped, tag = 'internal scratch']
  %s0 = inlined_call_operand.vmem [shape: f32[2,128,64], index: 0, kind: input, shape index: {}]
  %s1 = inlined_call_operand.vmem [shape: f32[16,128], index: 1, kind: input, shape index: {}]
  %s2 = inlined_call_operand.vmem [shape: f32[16,1], index: 2, kind: input, shape index: {}]
  %s3 = inlined_call_operand.vmem [shape: f32[16,1], index: 3, kind: input, shape index: {}]
  %s4 = inlined_call_operand.vmem [shape: f32[2,16,64], index: 4, kind: output, shape index: {}]
  %s5 = sld [smem:[#allocation0]]
  $region49: #{_lambda_.6} parent=0
    _
  %s7 = ssub.s32 1, %s5
  %s8 = scalar_select 0, %s7, %s5
  loop: start=0, step=1, limit=4
  $region2: #{_lambda_.6} parent=0 // loop_pre_header
    _
  $region3: #{_lambda_.6} parent=0 // loop_header
    %s10 = sphi 0, %s14
    %p11 = scmp.ge.s32.totalorder %s10, 4
    %s20 = sphi 0, %s22
    %s23 = sphi 0, %s20
    %s24 = sphi 0, %s23
    %s40 = sphi 0, %s24
    %s44 = sphi 0, %s44
    %s46 = sphi 0, %s44
    %s47 = sphi 0, %s46
    %s61 = sphi 0, %s47
    %s65 = sphi 0, %s65
    %s67 = sphi 0, %s65
    %s68 = sphi 0, %s67
    %s82 = sphi 0, %s68
    %s86 = sphi 0, %s86
    %s88 = sphi 0, %s86
    %s89 = sphi 0, %s88
    %s103 = sphi 0, %s89
    %s109 = sphi 0, %s111
    %s112 = sphi 0, %s109
    %s113 = sphi 0, %s112
    %s129 = sphi 0, %s113
  $region4: #{_lambda_.6} parent=0 // loop_header_branch
    %13 = sbr.rel (%p11) target = $region8
  $region5: #{_lambda_.6} parent=0 // loop_body
    %s15 = ssub.s32 %s10, 1
    %s16 = ssub.s32 %s10, 2
    %s17 = sadd.s32 %s10, 1
    %s18 = ssub.s32 %s10, %s17
    %p19 = scmp.eq.s32.totalorder %s18, 0
    %s21 = sadd.s32 %s20, 1
    %s22 = scalar_select %p19, %s20, %s21
    %p25 = pneg %p19
    %p26 = scmp.eq.s32.totalorder %s10, 1
    %p27 = por %p25, %p26
    %p28 = scmp.ne.s32.totalorder %s20, %s23
    %p29 = scmp.eq.s32.totalorder %s10, 0
    %p30 = por %p28, %p29
    %p31 = scmp.ne.s32.totalorder %s20, %s23
    %p32 = scmp.eq.s32.totalorder %s15, 1
    %p33 = por %p31, %p32
    %p34 = scmp.ne.s32.totalorder %s23, %s24
    %p35 = scmp.eq.s32.totalorder %s15, 0
    %p36 = por %p34, %p35
    %p37 = scmp.ne.s32.totalorder %s23, %s24
    %p38 = scmp.eq.s32.totalorder %s16, 1
    %p39 = por %p37, %p38
    %p41 = scmp.ne.s32.totalorder %s24, %s40
    %p42 = scmp.eq.s32.totalorder %s16, 0
    %p43 = por %p41, %p42
    %s45 = sadd.s32 %s44, 1
    %p48 = scmp.eq.s32.totalorder %s10, 1
    %p49 = scmp.ne.s32.totalorder %s44, %s46
    %p50 = scmp.eq.s32.totalorder %s10, 0
    %p51 = por %p49, %p50
    %p52 = scmp.ne.s32.totalorder %s44, %s46
    %p53 = scmp.eq.s32.totalorder %s15, 1
    %p54 = por %p52, %p53
    %p55 = scmp.ne.s32.totalorder %s46, %s47
    %p56 = scmp.eq.s32.totalorder %s15, 0
    %p57 = por %p55, %p56
    %p58 = scmp.ne.s32.totalorder %s46, %s47
    %p59 = scmp.eq.s32.totalorder %s16, 1
    %p60 = por %p58, %p59
    %p62 = scmp.ne.s32.totalorder %s47, %s61
    %p63 = scmp.eq.s32.totalorder %s16, 0
    %p64 = por %p62, %p63
    %s66 = sadd.s32 %s65, 1
    %p69 = scmp.eq.s32.totalorder %s10, 1
    %p70 = scmp.ne.s32.totalorder %s65, %s67
    %p71 = scmp.eq.s32.totalorder %s10, 0
    %p72 = por %p70, %p71
    %p73 = scmp.ne.s32.totalorder %s65, %s67
    %p74 = scmp.eq.s32.totalorder %s15, 1
    %p75 = por %p73, %p74
    %p76 = scmp.ne.s32.totalorder %s67, %s68
    %p77 = scmp.eq.s32.totalorder %s15, 0
    %p78 = por %p76, %p77
    %p79 = scmp.ne.s32.totalorder %s67, %s68
    %p80 = scmp.eq.s32.totalorder %s16, 1
    %p81 = por %p79, %p80
    %p83 = scmp.ne.s32.totalorder %s68, %s82
    %p84 = scmp.eq.s32.totalorder %s16, 0
    %p85 = por %p83, %p84
    %s87 = sadd.s32 %s86, 1
    %p90 = scmp.eq.s32.totalorder %s10, 1
    %p91 = scmp.ne.s32.totalorder %s86, %s88
    %p92 = scmp.eq.s32.totalorder %s10, 0
    %p93 = por %p91, %p92
    %p94 = scmp.ne.s32.totalorder %s86, %s88
    %p95 = scmp.eq.s32.totalorder %s15, 1
    %p96 = por %p94, %p95
    %p97 = scmp.ne.s32.totalorder %s88, %s89
    %p98 = scmp.eq.s32.totalorder %s15, 0
    %p99 = por %p97, %p98
    %p100 = scmp.ne.s32.totalorder %s88, %s89
    %p101 = scmp.eq.s32.totalorder %s16, 1
    %p102 = por %p100, %p101
    %p104 = scmp.ne.s32.totalorder %s89, %s103
    %p105 = scmp.eq.s32.totalorder %s16, 0
    %p106 = por %p104, %p105
    %s107 = ssub.s32 %s10, %s17
    %p108 = scmp.eq.s32.totalorder %s107, 0
    %s110 = sadd.s32 %s109, 1
    %s111 = scalar_select %p108, %s109, %s110
    %p114 = pneg %p108
    %p115 = scmp.eq.s32.totalorder %s10, 1
    %p116 = por %p114, %p115
    %p117 = scmp.ne.s32.totalorder %s109, %s112
    %p118 = scmp.eq.s32.totalorder %s10, 0
    %p119 = por %p117, %p118
    %p120 = scmp.ne.s32.totalorder %s109, %s112
    %p121 = scmp.eq.s32.totalorder %s15, 1
    %p122 = por %p120, %p121
    %p123 = scmp.ne.s32.totalorder %s112, %s113
    %p124 = scmp.eq.s32.totalorder %s15, 0
    %p125 = por %p123, %p124
    %p126 = scmp.ne.s32.totalorder %s112, %s113
    %p127 = scmp.eq.s32.totalorder %s16, 1
    %p128 = por %p126, %p127
    %p130 = scmp.ne.s32.totalorder %s113, %s129
    %p131 = scmp.eq.s32.totalorder %s16, 0
    %p132 = por %p130, %p131
    %p133 = scmp.le.s32.totalorder 1, %s10
    %p134 = scmp.lt.s32.totalorder %s10, 3
    %p135 = pnand %p133, %p134
    %p136 = pneg %p135
    // Predicated region
    $region9: #{_lambda_.6} parent=5 // pred_check
      _
    $region10: #{_lambda_.6} parent=5 // pred_check_branch
      %138 = sbr.rel (%p135) target = $region12
    $region11: #{_lambda_.6} parent=5 // pred_region
      %s139 = ssub.s32 %s10, 1
      // Predicated region
      $region13: #{_lambda_.6} parent=11 // pred_check
        %p140 = pneg %p57
      $region14: #{_lambda_.6} parent=11 // pred_check_branch
        %142 = sbr.rel (%p140) target = $region16
      $region15: #{_lambda_.6} parent=11 // pred_region
        _
      $region16: #{_lambda_.6} parent=11 // pred_fallthru
        _
      // Predicated region
      $region17: #{_lambda_.6} parent=11 // pred_check
        %p143 = pneg %p78
      $region18: #{_lambda_.6} parent=11 // pred_check_branch
        %145 = sbr.rel (%p143) target = $region20
      $region19: #{_lambda_.6} parent=11 // pred_region
        _
      $region20: #{_lambda_.6} parent=11 // pred_fallthru
        _
      // Predicated region
      $region21: #{_lambda_.6} parent=11 // pred_check
        %p146 = pneg %p99
      $region22: #{_lambda_.6} parent=11 // pred_check_branch
        %148 = sbr.rel (%p146) target = $region24
      $region23: #{_lambda_.6} parent=11 // pred_region
        _
      $region24: #{_lambda_.6} parent=11 // pred_fallthru
        _
    $region12: #{_lambda_.6} parent=5 // pred_fallthru
      _
    %p149 = scmp.lt.s32.totalorder %s10, 2
    // Predicated region
    $region25: #{_lambda_.6} parent=5 // pred_check
      %p150 = pneg %p149
    $region26: #{_lambda_.6} parent=5 // pred_check_branch
      %152 = sbr.rel (%p150) target = $region28
    $region27: #{_lambda_.6} parent=5 // pred_region
      // Predicated region
      $region29: #{_lambda_.6} parent=27 // pred_check
        %p153 = pneg %p30
      $region30: #{_lambda_.6} parent=27 // pred_check_branch
        %155 = sbr.rel (%p153) target = $region32
      $region31: #{_lambda_.6} parent=27 // pred_region
        %p156 = scmp.lt.s32.totalorder %s10, 1
        %s157 = scalar_select %p156, %s10, 1
        %s158 = smul.addr %s157, 16
        %s159 = smul.addr %s158, 8
        %s160 = scalar_lea.vmem %s0, %s159
      $region32: #{_lambda_.6} parent=27 // pred_fallthru
        _
    $region28: #{_lambda_.6} parent=5 // pred_fallthru
      _
    %p161 = scmp.le.s32.totalorder 1, %s10
    %p162 = scmp.lt.s32.totalorder %s10, 3
    %p163 = pnand %p161, %p162
    %p164 = pneg %p163
    // Predicated region
    $region33: #{_lambda_.6} parent=5 // pred_check
      _
    $region34: #{_lambda_.6} parent=5 // pred_check_branch
      %166 = sbr.rel (%p163) target = $region36
    $region35: #{_lambda_.6} parent=5 // pred_region
      %s167 = ssub.s32 %s10, 1
      %p168 = scmp.lt.s32.totalorder %s15, 1
      %s169 = scalar_select %p168, %s15, 1
      %s170 = smul.addr %s169, 16
      %s171 = smul.addr %s170, 8
      %s172 = scalar_lea.vmem %s0, %s171
      %p173 = pneg %p36
      %p174 = pneg %p33
      %p175 = pneg %p57
      %p176 = pneg %p54
      %p177 = pneg %p78
      %p178 = pneg %p75
      %p179 = pneg %p99
      %p180 = pneg %p96
      %p181 = pneg %p125
      %p182 = pneg %p122
      %p183 = scmp.lt.s32.totalorder %s15, 1
      %s184 = scalar_select %p183, %s15, 1
      %s185 = smul.addr %s184, 2
      %s186 = smul.addr %s185, 8
      %s187 = scalar_lea.vmem %s4, %s186
      %p188 = scmp.lt.s32.totalorder %s15, 1
      %s189 = scalar_select %p188, %s15, 1
      %s190 = smul.addr %s189, 16
      %s191 = smul.addr %s190, 8
      %s192 = scalar_lea.vmem %s0, %s191
      %p193 = scmp.lt.s32.totalorder %s15, 1
      %s194 = scalar_select %p193, %s15, 1
      %s195 = smul.addr %s194, 2
      %s196 = smul.addr %s195, 8
      %s197 = scalar_lea.vmem %s4, %s196
      %v198 = vld [vmem:[%s1] sm:$0xff]
      %v199 = vld [vmem:[%s1 + $0x8] sm:$0xff]
      %v200 = vld [vmem:[%s192] sm:$0xff]
      %v201 = vld [vmem:[%s192 + $0x8] sm:$0xff]
      %v202 = vld [vmem:[%s192 + $0x10] sm:$0xff]
      %v203 = vld [vmem:[%s192 + $0x18] sm:$0xff]
      %v204 = vld [vmem:[%s192 + $0x20] sm:$0xff]
      %v205 = vld [vmem:[%s192 + $0x28] sm:$0xff]
      %v206 = vld [vmem:[%s192 + $0x30] sm:$0xff]
      %v207 = vld [vmem:[%s192 + $0x38] sm:$0xff]
      %v208 = vld [vmem:[%s192 + $0x40] sm:$0xff]
      %v209 = vld [vmem:[%s192 + $0x48] sm:$0xff]
      %v210 = vld [vmem:[%s192 + $0x50] sm:$0xff]
      %v211 = vld [vmem:[%s192 + $0x58] sm:$0xff]
      %v212 = vld [vmem:[%s192 + $0x60] sm:$0xff]
      %v213 = vld [vmem:[%s192 + $0x68] sm:$0xff]
      %v214 = vld [vmem:[%s192 + $0x70] sm:$0xff]
      %v215 = vld [vmem:[%s192 + $0x78] sm:$0xff]
      %216 = vmatprep.subr.mxu0 0.0
      %217 = vmatpush1.msra.mxu0 %v215
      %218 = vmatprep.subr.mxu0 0.0
      %219 = vmatpush1.msra.mxu0 %v214
      %220 = vmatprep.subr.mxu0 0.0
      %221 = vmatpush1.msra.mxu0 %v213
      %222 = vmatprep.subr.mxu0 0.0
      %223 = vmatpush1.msra.mxu0 %v212
      %224 = vmatprep.subr.mxu0 0.0
      %225 = vmatpush1.msra.mxu0 %v211
      %226 = vmatprep.subr.mxu0 0.0
      %227 = vmatpush1.msra.mxu0 %v210
      %228 = vmatprep.subr.mxu0 0.0
      %229 = vmatpush1.msra.mxu0 %v209
      %230 = vmatprep.subr.mxu0 0.0
      %231 = vmatpush1.msra.mxu0 %v208
      %232 = vmatprep.subr.mxu0 0.0
      %233 = vmatpush1.msra.mxu0 %v207
      %234 = vmatprep.subr.mxu0 0.0
      %235 = vmatpush1.msra.mxu0 %v206
      %236 = vmatprep.subr.mxu0 0.0
      %237 = vmatpush1.msra.mxu0 %v205
      %238 = vmatprep.subr.mxu0 0.0
      %239 = vmatpush1.msra.mxu0 %v204
      %240 = vmatprep.subr.mxu0 0.0
      %241 = vmatpush1.msra.mxu0 %v203
      %242 = vmatprep.subr.mxu0 0.0
      %243 = vmatpush1.msra.mxu0 %v202
      %244 = vmatprep.subr.mxu0 0.0
      %245 = vmatpush1.msra.mxu0 %v201
      %246 = vmatprep.subr.mxu0 0.0
      %247 = vmatpush1.msra.mxu0 %v200
      %248 = vmatprep.subr.mxu0 0.0
      %249 = vmatpush2.msra.mxu0 0.0
      %250 = vmatprep.subr.mxu0 0.0
      %251 = vmatpush2.msra.mxu0 0.0
      %252 = vmatprep.subr.mxu0 0.0
      %253 = vmatpush2.msra.mxu0 0.0
      %254 = vmatprep.subr.mxu0 0.0
      %255 = vmatpush2.msra.mxu0 0.0
      %256 = vmatprep.subr.mxu0 0.0
      %257 = vmatpush2.msra.mxu0 0.0
      %258 = vmatprep.subr.mxu0 0.0
      %259 = vmatpush2.msra.mxu0 0.0
      %260 = vmatprep.subr.mxu0 0.0
      %261 = vmatpush2.msra.mxu0 0.0
      %262 = vmatprep.subr.mxu0 0.0
      %263 = vmatpush2.msra.mxu0 0.0
      %264 = vmatprep.subr.mxu0 0.0
      %265 = vmatpush2.msra.mxu0 0.0
      %266 = vmatprep.subr.mxu0 0.0
      %267 = vmatpush2.msra.mxu0 0.0
      %268 = vmatprep.subr.mxu0 0.0
      %269 = vmatpush2.msra.mxu0 0.0
      %270 = vmatprep.subr.mxu0 0.0
      %271 = vmatpush2.msra.mxu0 0.0
      %272 = vmatprep.subr.mxu0 0.0
      %273 = vmatpush2.msra.mxu0 0.0
      %274 = vmatprep.subr.mxu0 0.0
      %275 = vmatpush2.msra.mxu0 0.0
      %276 = vmatprep.subr.mxu0 0.0
      %277 = vmatpush2.msra.mxu0 0.0
      %278 = vmatprep.subr.mxu0 0.0
      %279 = vmatpush2.msra.mxu0 0.0
      %280 = vmatprep.mubr.f32.mxu0 0.0
      %281 = vmatmul.mubr.f32.gmra.mxu0 %v198
      %v282 = vpop.f32.mrf.mxu0
      %v283 = vadd.f32 0.0, %v282
      %v284 = vpop.f32.mrf.mxu0
      %285 = vmatprep.mubr.f32.mxu0 0.0
      %286 = vmatmul.mubr.f32.gmra.mxu0 %v199
      %v287 = vpop.f32.mrf.mxu0
      %v288 = vadd.f32 0.0, %v287
      %v289 = vpop.f32.mrf.mxu0
      %290 = vdwg.mxu0
      %v291 = vld [vmem:[%s2] sm:$0xff]
      %v292 = vld [vmem:[%s2 + $0x8] sm:$0xff]
      %294 = vset.pattern.permute.xlu0 0
      %295 = vperm.xlu0 %294, %v291
      %v296 = vpop.permute.xlu0 %295
      %299 = vset.pattern.permute.xlu0 0
      %300 = vperm.xlu0 %299, %v292
      %v301 = vpop.permute.xlu0 %300
      %v303 = vmul.f32 %v283, %v296
      %v304 = vmul.f32 %v288, %v301
      %v305 = vld [vmem:[%s3] sm:$0xff]
      %v306 = vld [vmem:[%s3 + $0x8] sm:$0xff]
      %308 = vset.pattern.permute.xlu0 0
      %309 = vperm.xlu0 %308, %v305
      %v310 = vpop.permute.xlu0 %309
      %313 = vset.pattern.permute.xlu0 0
      %314 = vperm.xlu0 %313, %v306
      %v315 = vpop.permute.xlu0 %314
      %v317 = vadd.f32 %v303, %v310
      %v318 = vadd.f32 %v304, %v315
      %vm319 = vcmp.ge.f32.partialorder %v317, 0.0
      %vm320 = vcmp.ge.f32.partialorder %v318, 0.0
      %v321 = vmul.f32 %v317, 0.2
      %v322 = vmul.f32 %v318, 0.2
      %v323 = vsel %vm319, %v317, %v321
      %v324 = vsel %vm320, %v318, %v322
      %vm325 = vcmask 523264
      %326 = vst.msk [vmem:[%s197] sm:$0xff] %vm325, %v323
      %327 = vst.msk [vmem:[%s197 + $0x8] sm:$0xff] %vm325, %v324
      %p328 = scmp.lt.s32.totalorder %s15, 1
      %s329 = scalar_select %p328, %s15, 1
      %s330 = smul.addr %s329, 2
      %s331 = smul.addr %s330, 8
      %s332 = scalar_lea.vmem %s4, %s331
      // Predicated region
      $region37: #{_lambda_.6} parent=35 // pred_check
        %p333 = pneg %p122
      $region38: #{_lambda_.6} parent=35 // pred_check_branch
        %335 = sbr.rel (%p333) target = $region40
      $region39: #{_lambda_.6} parent=35 // pred_region
        _
      $region40: #{_lambda_.6} parent=35 // pred_fallthru
        _
    $region36: #{_lambda_.6} parent=5 // pred_fallthru
      _
    %p336 = scmp.le.s32.totalorder 2, %s10
    // Predicated region
    $region41: #{_lambda_.6} parent=5 // pred_check
      %p337 = pneg %p336
    $region42: #{_lambda_.6} parent=5 // pred_check_branch
      %339 = sbr.rel (%p337) target = $region44
    $region43: #{_lambda_.6} parent=5 // pred_region
      %s340 = ssub.s32 %s10, 2
      // Predicated region
      $region45: #{_lambda_.6} parent=43 // pred_check
        %p341 = pneg %p128
      $region46: #{_lambda_.6} parent=43 // pred_check_branch
        %343 = sbr.rel (%p341) target = $region48
      $region47: #{_lambda_.6} parent=43 // pred_region
        %p344 = scmp.lt.s32.totalorder %s16, 1
        %s345 = scalar_select %p344, %s16, 1
        %s346 = smul.addr %s345, 2
        %s347 = smul.addr %s346, 8
        %s348 = scalar_lea.vmem %s4, %s347
      $region48: #{_lambda_.6} parent=43 // pred_fallthru
        _
    $region44: #{_lambda_.6} parent=5 // pred_fallthru
      _
  $region6: #{_lambda_.6} parent=0 // loop_footer
    %s14 = sadd.s32 1, %s10
  $region7: #{_lambda_.6} parent=0 // loop_footer_branch
    %9 = sbr.rel target = $region3
  $region8: #{_lambda_.6} parent=0 // loop_exit
    _

// kernel: _lambda_.7
$region0: #{_lambda_.7}
  #allocation0 [shape = 'u32[]', space=smem, size = 0x4, offset = 0x4, fixed_abs, tag = 'smem constant byte address 0x4 - core index']
  #allocation1 [shape = 'u32[144,128]{1,0:T(1,128)}', space=vmem, size = 0x12000, scoped, tag = 'internal scratch']
  %s0 = inlined_call_operand.vmem [shape: f32[2,256,16], index: 0, kind: input, shape index: {}]
  %s1 = inlined_call_operand.vmem [shape: f32[32,256], index: 1, kind: input, shape index: {}]
  %s2 = inlined_call_operand.vmem [shape: f32[32,1], index: 2, kind: input, shape index: {}]
  %s3 = inlined_call_operand.vmem [shape: f32[32,1], index: 3, kind: input, shape index: {}]
  %s4 = inlined_call_operand.vmem [shape: f32[2,32,16], index: 4, kind: output, shape index: {}]
  %s5 = sld [smem:[#allocation0]]
  $region49: #{_lambda_.7} parent=0
    _
  %s7 = ssub.s32 1, %s5
  %s8 = scalar_select 0, %s7, %s5
  loop: start=0, step=1, limit=4
  $region2: #{_lambda_.7} parent=0 // loop_pre_header
    _
  $region3: #{_lambda_.7} parent=0 // loop_header
    %s10 = sphi 0, %s14
    %p11 = scmp.ge.s32.totalorder %s10, 4
    %s20 = sphi 0, %s22
    %s23 = sphi 0, %s20
    %s24 = sphi 0, %s23
    %s40 = sphi 0, %s24
    %s44 = sphi 0, %s44
    %s46 = sphi 0, %s44
    %s47 = sphi 0, %s46
    %s61 = sphi 0, %s47
    %s65 = sphi 0, %s65
    %s67 = sphi 0, %s65
    %s68 = sphi 0, %s67
    %s82 = sphi 0, %s68
    %s86 = sphi 0, %s86
    %s88 = sphi 0, %s86
    %s89 = sphi 0, %s88
    %s103 = sphi 0, %s89
    %s109 = sphi 0, %s111
    %s112 = sphi 0, %s109
    %s113 = sphi 0, %s112
    %s129 = sphi 0, %s113
  $region4: #{_lambda_.7} parent=0 // loop_header_branch
    %13 = sbr.rel (%p11) target = $region8
  $region5: #{_lambda_.7} parent=0 // loop_body
    %s15 = ssub.s32 %s10, 1
    %s16 = ssub.s32 %s10, 2
    %s17 = sadd.s32 %s10, 1
    %s18 = ssub.s32 %s10, %s17
    %p19 = scmp.eq.s32.totalorder %s18, 0
    %s21 = sadd.s32 %s20, 1
    %s22 = scalar_select %p19, %s20, %s21
    %p25 = pneg %p19
    %p26 = scmp.eq.s32.totalorder %s10, 1
    %p27 = por %p25, %p26
    %p28 = scmp.ne.s32.totalorder %s20, %s23
    %p29 = scmp.eq.s32.totalorder %s10, 0
    %p30 = por %p28, %p29
    %p31 = scmp.ne.s32.totalorder %s20, %s23
    %p32 = scmp.eq.s32.totalorder %s15, 1
    %p33 = por %p31, %p32
    %p34 = scmp.ne.s32.totalorder %s23, %s24
    %p35 = scmp.eq.s32.totalorder %s15, 0
    %p36 = por %p34, %p35
    %p37 = scmp.ne.s32.totalorder %s23, %s24
    %p38 = scmp.eq.s32.totalorder %s16, 1
    %p39 = por %p37, %p38
    %p41 = scmp.ne.s32.totalorder %s24, %s40
    %p42 = scmp.eq.s32.totalorder %s16, 0
    %p43 = por %p41, %p42
    %s45 = sadd.s32 %s44, 1
    %p48 = scmp.eq.s32.totalorder %s10, 1
    %p49 = scmp.ne.s32.totalorder %s44, %s46
    %p50 = scmp.eq.s32.totalorder %s10, 0
    %p51 = por %p49, %p50
    %p52 = scmp.ne.s32.totalorder %s44, %s46
    %p53 = scmp.eq.s32.totalorder %s15, 1
    %p54 = por %p52, %p53
    %p55 = scmp.ne.s32.totalorder %s46, %s47
    %p56 = scmp.eq.s32.totalorder %s15, 0
    %p57 = por %p55, %p56
    %p58 = scmp.ne.s32.totalorder %s46, %s47
    %p59 = scmp.eq.s32.totalorder %s16, 1
    %p60 = por %p58, %p59
    %p62 = scmp.ne.s32.totalorder %s47, %s61
    %p63 = scmp.eq.s32.totalorder %s16, 0
    %p64 = por %p62, %p63
    %s66 = sadd.s32 %s65, 1
    %p69 = scmp.eq.s32.totalorder %s10, 1
    %p70 = scmp.ne.s32.totalorder %s65, %s67
    %p71 = scmp.eq.s32.totalorder %s10, 0
    %p72 = por %p70, %p71
    %p73 = scmp.ne.s32.totalorder %s65, %s67
    %p74 = scmp.eq.s32.totalorder %s15, 1
    %p75 = por %p73, %p74
    %p76 = scmp.ne.s32.totalorder %s67, %s68
    %p77 = scmp.eq.s32.totalorder %s15, 0
    %p78 = por %p76, %p77
    %p79 = scmp.ne.s32.totalorder %s67, %s68
    %p80 = scmp.eq.s32.totalorder %s16, 1
    %p81 = por %p79, %p80
    %p83 = scmp.ne.s32.totalorder %s68, %s82
    %p84 = scmp.eq.s32.totalorder %s16, 0
    %p85 = por %p83, %p84
    %s87 = sadd.s32 %s86, 1
    %p90 = scmp.eq.s32.totalorder %s10, 1
    %p91 = scmp.ne.s32.totalorder %s86, %s88
    %p92 = scmp.eq.s32.totalorder %s10, 0
    %p93 = por %p91, %p92
    %p94 = scmp.ne.s32.totalorder %s86, %s88
    %p95 = scmp.eq.s32.totalorder %s15, 1
    %p96 = por %p94, %p95
    %p97 = scmp.ne.s32.totalorder %s88, %s89
    %p98 = scmp.eq.s32.totalorder %s15, 0
    %p99 = por %p97, %p98
    %p100 = scmp.ne.s32.totalorder %s88, %s89
    %p101 = scmp.eq.s32.totalorder %s16, 1
    %p102 = por %p100, %p101
    %p104 = scmp.ne.s32.totalorder %s89, %s103
    %p105 = scmp.eq.s32.totalorder %s16, 0
    %p106 = por %p104, %p105
    %s107 = ssub.s32 %s10, %s17
    %p108 = scmp.eq.s32.totalorder %s107, 0
    %s110 = sadd.s32 %s109, 1
    %s111 = scalar_select %p108, %s109, %s110
    %p114 = pneg %p108
    %p115 = scmp.eq.s32.totalorder %s10, 1
    %p116 = por %p114, %p115
    %p117 = scmp.ne.s32.totalorder %s109, %s112
    %p118 = scmp.eq.s32.totalorder %s10, 0
    %p119 = por %p117, %p118
    %p120 = scmp.ne.s32.totalorder %s109, %s112
    %p121 = scmp.eq.s32.totalorder %s15, 1
    %p122 = por %p120, %p121
    %p123 = scmp.ne.s32.totalorder %s112, %s113
    %p124 = scmp.eq.s32.totalorder %s15, 0
    %p125 = por %p123, %p124
    %p126 = scmp.ne.s32.totalorder %s112, %s113
    %p127 = scmp.eq.s32.totalorder %s16, 1
    %p128 = por %p126, %p127
    %p130 = scmp.ne.s32.totalorder %s113, %s129
    %p131 = scmp.eq.s32.totalorder %s16, 0
    %p132 = por %p130, %p131
    %p133 = scmp.le.s32.totalorder 1, %s10
    %p134 = scmp.lt.s32.totalorder %s10, 3
    %p135 = pnand %p133, %p134
    %p136 = pneg %p135
    // Predicated region
    $region9: #{_lambda_.7} parent=5 // pred_check
      _
    $region10: #{_lambda_.7} parent=5 // pred_check_branch
      %138 = sbr.rel (%p135) target = $region12
    $region11: #{_lambda_.7} parent=5 // pred_region
      %s139 = ssub.s32 %s10, 1
      // Predicated region
      $region13: #{_lambda_.7} parent=11 // pred_check
        %p140 = pneg %p57
      $region14: #{_lambda_.7} parent=11 // pred_check_branch
        %142 = sbr.rel (%p140) target = $region16
      $region15: #{_lambda_.7} parent=11 // pred_region
        _
      $region16: #{_lambda_.7} parent=11 // pred_fallthru
        _
      // Predicated region
      $region17: #{_lambda_.7} parent=11 // pred_check
        %p143 = pneg %p78
      $region18: #{_lambda_.7} parent=11 // pred_check_branch
        %145 = sbr.rel (%p143) target = $region20
      $region19: #{_lambda_.7} parent=11 // pred_region
        _
      $region20: #{_lambda_.7} parent=11 // pred_fallthru
        _
      // Predicated region
      $region21: #{_lambda_.7} parent=11 // pred_check
        %p146 = pneg %p99
      $region22: #{_lambda_.7} parent=11 // pred_check_branch
        %148 = sbr.rel (%p146) target = $region24
      $region23: #{_lambda_.7} parent=11 // pred_region
        _
      $region24: #{_lambda_.7} parent=11 // pred_fallthru
        _
    $region12: #{_lambda_.7} parent=5 // pred_fallthru
      _
    %p149 = scmp.lt.s32.totalorder %s10, 2
    // Predicated region
    $region25: #{_lambda_.7} parent=5 // pred_check
      %p150 = pneg %p149
    $region26: #{_lambda_.7} parent=5 // pred_check_branch
      %152 = sbr.rel (%p150) target = $region28
    $region27: #{_lambda_.7} parent=5 // pred_region
      // Predicated region
      $region29: #{_lambda_.7} parent=27 // pred_check
        %p153 = pneg %p30
      $region30: #{_lambda_.7} parent=27 // pred_check_branch
        %155 = sbr.rel (%p153) target = $region32
      $region31: #{_lambda_.7} parent=27 // pred_region
        %p156 = scmp.lt.s32.totalorder %s10, 1
        %s157 = scalar_select %p156, %s10, 1
        %s158 = smul.addr %s157, 32
        %s159 = smul.addr %s158, 8
        %s160 = scalar_lea.vmem %s0, %s159
      $region32: #{_lambda_.7} parent=27 // pred_fallthru
        _
    $region28: #{_lambda_.7} parent=5 // pred_fallthru
      _
    %p161 = scmp.le.s32.totalorder 1, %s10
    %p162 = scmp.lt.s32.totalorder %s10, 3
    %p163 = pnand %p161, %p162
    %p164 = pneg %p163
    // Predicated region
    $region33: #{_lambda_.7} parent=5 // pred_check
      _
    $region34: #{_lambda_.7} parent=5 // pred_check_branch
      %166 = sbr.rel (%p163) target = $region36
    $region35: #{_lambda_.7} parent=5 // pred_region
      %s167 = ssub.s32 %s10, 1
      %p168 = scmp.lt.s32.totalorder %s15, 1
      %s169 = scalar_select %p168, %s15, 1
      %s170 = smul.addr %s169, 32
      %s171 = smul.addr %s170, 8
      %s172 = scalar_lea.vmem %s0, %s171
      %p173 = pneg %p36
      %p174 = pneg %p33
      %p175 = pneg %p57
      %p176 = pneg %p54
      %p177 = pneg %p78
      %p178 = pneg %p75
      %p179 = pneg %p99
      %p180 = pneg %p96
      %p181 = pneg %p125
      %p182 = pneg %p122
      %p183 = scmp.lt.s32.totalorder %s15, 1
      %s184 = scalar_select %p183, %s15, 1
      %s185 = smul.addr %s184, 4
      %s186 = smul.addr %s185, 8
      %s187 = scalar_lea.vmem %s4, %s186
      %p188 = scmp.lt.s32.totalorder %s15, 1
      %s189 = scalar_select %p188, %s15, 1
      %s190 = smul.addr %s189, 32
      %s191 = smul.addr %s190, 8
      %s192 = scalar_lea.vmem %s0, %s191
      %p193 = scmp.lt.s32.totalorder %s15, 1
      %s194 = scalar_select %p193, %s15, 1
      %s195 = smul.addr %s194, 4
      %s196 = smul.addr %s195, 8
      %s197 = scalar_lea.vmem %s4, %s196
      %v198 = vld [vmem:[%s1] sm:$0xff]
      %v199 = vld [vmem:[%s1 + $0x8] sm:$0xff]
      %v200 = vld [vmem:[%s1 + $0x10] sm:$0xff]
      %v201 = vld [vmem:[%s1 + $0x18] sm:$0xff]
      %v202 = vld [vmem:[%s1 + $0x20] sm:$0xff]
      %v203 = vld [vmem:[%s1 + $0x28] sm:$0xff]
      %v204 = vld [vmem:[%s1 + $0x30] sm:$0xff]
      %v205 = vld [vmem:[%s1 + $0x38] sm:$0xff]
      %v206 = vld [vmem:[%s192] sm:$0xff]
      %v207 = vld [vmem:[%s192 + $0x8] sm:$0xff]
      %v208 = vld [vmem:[%s192 + $0x10] sm:$0xff]
      %v209 = vld [vmem:[%s192 + $0x18] sm:$0xff]
      %v210 = vld [vmem:[%s192 + $0x20] sm:$0xff]
      %v211 = vld [vmem:[%s192 + $0x28] sm:$0xff]
      %v212 = vld [vmem:[%s192 + $0x30] sm:$0xff]
      %v213 = vld [vmem:[%s192 + $0x38] sm:$0xff]
      %v214 = vld [vmem:[%s192 + $0x40] sm:$0xff]
      %v215 = vld [vmem:[%s192 + $0x48] sm:$0xff]
      %v216 = vld [vmem:[%s192 + $0x50] sm:$0xff]
      %v217 = vld [vmem:[%s192 + $0x58] sm:$0xff]
      %v218 = vld [vmem:[%s192 + $0x60] sm:$0xff]
      %v219 = vld [vmem:[%s192 + $0x68] sm:$0xff]
      %v220 = vld [vmem:[%s192 + $0x70] sm:$0xff]
      %v221 = vld [vmem:[%s192 + $0x78] sm:$0xff]
      %v222 = vld [vmem:[%s192 + $0x80] sm:$0xff]
      %v223 = vld [vmem:[%s192 + $0x88] sm:$0xff]
      %v224 = vld [vmem:[%s192 + $0x90] sm:$0xff]
      %v225 = vld [vmem:[%s192 + $0x98] sm:$0xff]
      %v226 = vld [vmem:[%s192 + $0xa0] sm:$0xff]
      %v227 = vld [vmem:[%s192 + $0xa8] sm:$0xff]
      %v228 = vld [vmem:[%s192 + $0xb0] sm:$0xff]
      %v229 = vld [vmem:[%s192 + $0xb8] sm:$0xff]
      %v230 = vld [vmem:[%s192 + $0xc0] sm:$0xff]
      %v231 = vld [vmem:[%s192 + $0xc8] sm:$0xff]
      %v232 = vld [vmem:[%s192 + $0xd0] sm:$0xff]
      %v233 = vld [vmem:[%s192 + $0xd8] sm:$0xff]
      %v234 = vld [vmem:[%s192 + $0xe0] sm:$0xff]
      %v235 = vld [vmem:[%s192 + $0xe8] sm:$0xff]
      %v236 = vld [vmem:[%s192 + $0xf0] sm:$0xff]
      %v237 = vld [vmem:[%s192 + $0xf8] sm:$0xff]
      %238 = vmatprep.subr.mxu0 0.0
      %239 = vmatpush1.msra.mxu0 %v221
      %240 = vmatprep.subr.mxu0 0.0
      %241 = vmatpush1.msra.mxu0 %v220
      %242 = vmatprep.subr.mxu0 0.0
      %243 = vmatpush1.msra.mxu0 %v219
      %244 = vmatprep.subr.mxu0 0.0
      %245 = vmatpush1.msra.mxu0 %v218
      %246 = vmatprep.subr.mxu0 0.0
      %247 = vmatpush1.msra.mxu0 %v217
      %248 = vmatprep.subr.mxu0 0.0
      %249 = vmatpush1.msra.mxu0 %v216
      %250 = vmatprep.subr.mxu0 0.0
      %251 = vmatpush1.msra.mxu0 %v215
      %252 = vmatprep.subr.mxu0 0.0
      %253 = vmatpush1.msra.mxu0 %v214
      %254 = vmatprep.subr.mxu0 0.0
      %255 = vmatpush1.msra.mxu0 %v213
      %256 = vmatprep.subr.mxu0 0.0
      %257 = vmatpush1.msra.mxu0 %v212
      %258 = vmatprep.subr.mxu0 0.0
      %259 = vmatpush1.msra.mxu0 %v211
      %260 = vmatprep.subr.mxu0 0.0
      %261 = vmatpush1.msra.mxu0 %v210
      %262 = vmatprep.subr.mxu0 0.0
      %263 = vmatpush1.msra.mxu0 %v209
      %264 = vmatprep.subr.mxu0 0.0
      %265 = vmatpush1.msra.mxu0 %v208
      %266 = vmatprep.subr.mxu0 0.0
      %267 = vmatpush1.msra.mxu0 %v207
      %268 = vmatprep.subr.mxu0 0.0
      %269 = vmatpush1.msra.mxu0 %v206
      %270 = vmatprep.subr.mxu0 0.0
      %271 = vmatpush2.msra.mxu0 %v237
      %272 = vmatprep.subr.mxu0 0.0
      %273 = vmatpush2.msra.mxu0 %v236
      %274 = vmatprep.subr.mxu0 0.0
      %275 = vmatpush2.msra.mxu0 %v235
      %276 = vmatprep.subr.mxu0 0.0
      %277 = vmatpush2.msra.mxu0 %v234
      %278 = vmatprep.subr.mxu0 0.0
      %279 = vmatpush2.msra.mxu0 %v233
      %280 = vmatprep.subr.mxu0 0.0
      %281 = vmatpush2.msra.mxu0 %v232
      %282 = vmatprep.subr.mxu0 0.0
      %283 = vmatpush2.msra.mxu0 %v231
      %284 = vmatprep.subr.mxu0 0.0
      %285 = vmatpush2.msra.mxu0 %v230
      %286 = vmatprep.subr.mxu0 0.0
      %287 = vmatpush2.msra.mxu0 %v229
      %288 = vmatprep.subr.mxu0 0.0
      %289 = vmatpush2.msra.mxu0 %v228
      %290 = vmatprep.subr.mxu0 0.0
      %291 = vmatpush2.msra.mxu0 %v227
      %292 = vmatprep.subr.mxu0 0.0
      %293 = vmatpush2.msra.mxu0 %v226
      %294 = vmatprep.subr.mxu0 0.0
      %295 = vmatpush2.msra.mxu0 %v225
      %296 = vmatprep.subr.mxu0 0.0
      %297 = vmatpush2.msra.mxu0 %v224
      %298 = vmatprep.subr.mxu0 0.0
      %299 = vmatpush2.msra.mxu0 %v223
      %300 = vmatprep.subr.mxu0 0.0
      %301 = vmatpush2.msra.mxu0 %v222
      %302 = vmatprep.mubr.f32.mxu0 %v199
      %303 = vmatmul.mubr.f32.gmra.mxu0 %v198
      %v304 = vpop.f32.mrf.mxu0
      %v305 = vadd.f32 0.0, %v304
      %v306 = vpop.f32.mrf.mxu0
      %307 = vmatprep.mubr.f32.mxu0 %v201
      %308 = vmatmul.mubr.f32.gmra.mxu0 %v200
      %v309 = vpop.f32.mrf.mxu0
      %v310 = vadd.f32 0.0, %v309
      %v311 = vpop.f32.mrf.mxu0
      %312 = vmatprep.mubr.f32.mxu0 %v203
      %313 = vmatmul.mubr.f32.gmra.mxu0 %v202
      %v314 = vpop.f32.mrf.mxu0
      %v315 = vadd.f32 0.0, %v314
      %v316 = vpop.f32.mrf.mxu0
      %317 = vmatprep.mubr.f32.mxu0 %v205
      %318 = vmatmul.mubr.f32.gmra.mxu0 %v204
      %v319 = vpop.f32.mrf.mxu0
      %v320 = vadd.f32 0.0, %v319
      %v321 = vpop.f32.mrf.mxu0
      %322 = vdwg.mxu0
      %v323 = vld [vmem:[%s2] sm:$0xff]
      %v324 = vld [vmem:[%s2 + $0x8] sm:$0xff]
      %v325 = vld [vmem:[%s2 + $0x10] sm:$0xff]
      %v326 = vld [vmem:[%s2 + $0x18] sm:$0xff]
      %328 = vset.pattern.permute.xlu0 0
      %329 = vperm.xlu0 %328, %v323
      %v330 = vpop.permute.xlu0 %329
      %333 = vset.pattern.permute.xlu0 0
      %334 = vperm.xlu0 %333, %v324
      %v335 = vpop.permute.xlu0 %334
      %338 = vset.pattern.permute.xlu0 0
      %339 = vperm.xlu0 %338, %v325
      %v340 = vpop.permute.xlu0 %339
      %343 = vset.pattern.permute.xlu0 0
      %344 = vperm.xlu0 %343, %v326
      %v345 = vpop.permute.xlu0 %344
      %v347 = vmul.f32 %v305, %v330
      %v348 = vmul.f32 %v310, %v335
      %v349 = vmul.f32 %v315, %v340
      %v350 = vmul.f32 %v320, %v345
      %v351 = vld [vmem:[%s3] sm:$0xff]
      %v352 = vld [vmem:[%s3 + $0x8] sm:$0xff]
      %v353 = vld [vmem:[%s3 + $0x10] sm:$0xff]
      %v354 = vld [vmem:[%s3 + $0x18] sm:$0xff]
      %356 = vset.pattern.permute.xlu0 0
      %357 = vperm.xlu0 %356, %v351
      %v358 = vpop.permute.xlu0 %357
      %361 = vset.pattern.permute.xlu0 0
      %362 = vperm.xlu0 %361, %v352
      %v363 = vpop.permute.xlu0 %362
      %366 = vset.pattern.permute.xlu0 0
      %367 = vperm.xlu0 %366, %v353
      %v368 = vpop.permute.xlu0 %367
      %371 = vset.pattern.permute.xlu0 0
      %372 = vperm.xlu0 %371, %v354
      %v373 = vpop.permute.xlu0 %372
      %v375 = vadd.f32 %v347, %v358
      %v376 = vadd.f32 %v348, %v363
      %v377 = vadd.f32 %v349, %v368
      %v378 = vadd.f32 %v350, %v373
      %vm379 = vcmp.ge.f32.partialorder %v375, 0.0
      %vm380 = vcmp.ge.f32.partialorder %v376, 0.0
      %vm381 = vcmp.ge.f32.partialorder %v377, 0.0
      %vm382 = vcmp.ge.f32.partialorder %v378, 0.0
      %v383 = vmul.f32 %v375, 0.2
      %v384 = vmul.f32 %v376, 0.2
      %v385 = vmul.f32 %v377, 0.2
      %v386 = vmul.f32 %v378, 0.2
      %v387 = vsel %vm379, %v375, %v383
      %v388 = vsel %vm380, %v376, %v384
      %v389 = vsel %vm381, %v377, %v385
      %v390 = vsel %vm382, %v378, %v386
      %vm391 = vcmask 130048
      %392 = vst.msk [vmem:[%s197] sm:$0xff] %vm391, %v387
      %393 = vst.msk [vmem:[%s197 + $0x8] sm:$0xff] %vm391, %v388
      %394 = vst.msk [vmem:[%s197 + $0x10] sm:$0xff] %vm391, %v389
      %395 = vst.msk [vmem:[%s197 + $0x18] sm:$0xff] %vm391, %v390
      %p396 = scmp.lt.s32.totalorder %s15, 1
      %s397 = scalar_select %p396, %s15, 1
      %s398 = smul.addr %s397, 4
      %s399 = smul.addr %s398, 8
      %s400 = scalar_lea.vmem %s4, %s399
      // Predicated region
      $region37: #{_lambda_.7} parent=35 // pred_check
        %p401 = pneg %p122
      $region38: #{_lambda_.7} parent=35 // pred_check_branch
        %403 = sbr.rel (%p401) target = $region40
      $region39: #{_lambda_.7} parent=35 // pred_region
        _
      $region40: #{_lambda_.7} parent=35 // pred_fallthru
        _
    $region36: #{_lambda_.7} parent=5 // pred_fallthru
      _
    %p404 = scmp.le.s32.totalorder 2, %s10
    // Predicated region
    $region41: #{_lambda_.7} parent=5 // pred_check
      %p405 = pneg %p404
    $region42: #{_lambda_.7} parent=5 // pred_check_branch
      %407 = sbr.rel (%p405) target = $region44
    $region43: #{_lambda_.7} parent=5 // pred_region
      %s408 = ssub.s32 %s10, 2
      // Predicated region
      $region45: #{_lambda_.7} parent=43 // pred_check
        %p409 = pneg %p128
      $region46: #{_lambda_.7} parent=43 // pred_check_branch
        %411 = sbr.rel (%p409) target = $region48
      $region47: #{_lambda_.7} parent=43 // pred_region
        %p412 = scmp.lt.s32.totalorder %s16, 1
        %s413 = scalar_select %p412, %s16, 1
        %s414 = smul.addr %s413, 4
        %s415 = smul.addr %s414, 8
        %s416 = scalar_lea.vmem %s4, %s415
      $region48: #{_lambda_.7} parent=43 // pred_fallthru
        _
    $region44: #{_lambda_.7} parent=5 // pred_fallthru
      _
  $region6: #{_lambda_.7} parent=0 // loop_footer
    %s14 = sadd.s32 1, %s10
  $region7: #{_lambda_.7} parent=0 // loop_footer_branch
    %9 = sbr.rel target = $region3
  $region8: #{_lambda_.7} parent=0 // loop_exit
    _

// kernel: _lambda_.8
$region0: #{_lambda_.8}
  #allocation0 [shape = 'u32[]', space=smem, size = 0x4, offset = 0x4, fixed_abs, tag = 'smem constant byte address 0x4 - core index']
  #allocation1 [shape = 'u32[144,128]{1,0:T(1,128)}', space=vmem, size = 0x12000, scoped, tag = 'internal scratch']
  %s0 = inlined_call_operand.vmem [shape: f32[2,512,9], index: 0, kind: input, shape index: {}]
  %s1 = inlined_call_operand.vmem [shape: f32[64,512], index: 1, kind: input, shape index: {}]
  %s2 = inlined_call_operand.vmem [shape: f32[64,1], index: 2, kind: input, shape index: {}]
  %s3 = inlined_call_operand.vmem [shape: f32[64,1], index: 3, kind: input, shape index: {}]
  %s4 = inlined_call_operand.vmem [shape: f32[2,64,9], index: 4, kind: output, shape index: {}]
  %s5 = sld [smem:[#allocation0]]
  $region49: #{_lambda_.8} parent=0
    _
  %s7 = ssub.s32 1, %s5
  %s8 = scalar_select 0, %s7, %s5
  loop: start=0, step=1, limit=4
  $region2: #{_lambda_.8} parent=0 // loop_pre_header
    _
  $region3: #{_lambda_.8} parent=0 // loop_header
    %s10 = sphi 0, %s14
    %p11 = scmp.ge.s32.totalorder %s10, 4
    %s20 = sphi 0, %s22
    %s23 = sphi 0, %s20
    %s24 = sphi 0, %s23
    %s40 = sphi 0, %s24
    %s44 = sphi 0, %s44
    %s46 = sphi 0, %s44
    %s47 = sphi 0, %s46
    %s61 = sphi 0, %s47
    %s65 = sphi 0, %s65
    %s67 = sphi 0, %s65
    %s68 = sphi 0, %s67
    %s82 = sphi 0, %s68
    %s86 = sphi 0, %s86
    %s88 = sphi 0, %s86
    %s89 = sphi 0, %s88
    %s103 = sphi 0, %s89
    %s109 = sphi 0, %s111
    %s112 = sphi 0, %s109
    %s113 = sphi 0, %s112
    %s129 = sphi 0, %s113
  $region4: #{_lambda_.8} parent=0 // loop_header_branch
    %13 = sbr.rel (%p11) target = $region8
  $region5: #{_lambda_.8} parent=0 // loop_body
    %s15 = ssub.s32 %s10, 1
    %s16 = ssub.s32 %s10, 2
    %s17 = sadd.s32 %s10, 1
    %s18 = ssub.s32 %s10, %s17
    %p19 = scmp.eq.s32.totalorder %s18, 0
    %s21 = sadd.s32 %s20, 1
    %s22 = scalar_select %p19, %s20, %s21
    %p25 = pneg %p19
    %p26 = scmp.eq.s32.totalorder %s10, 1
    %p27 = por %p25, %p26
    %p28 = scmp.ne.s32.totalorder %s20, %s23
    %p29 = scmp.eq.s32.totalorder %s10, 0
    %p30 = por %p28, %p29
    %p31 = scmp.ne.s32.totalorder %s20, %s23
    %p32 = scmp.eq.s32.totalorder %s15, 1
    %p33 = por %p31, %p32
    %p34 = scmp.ne.s32.totalorder %s23, %s24
    %p35 = scmp.eq.s32.totalorder %s15, 0
    %p36 = por %p34, %p35
    %p37 = scmp.ne.s32.totalorder %s23, %s24
    %p38 = scmp.eq.s32.totalorder %s16, 1
    %p39 = por %p37, %p38
    %p41 = scmp.ne.s32.totalorder %s24, %s40
    %p42 = scmp.eq.s32.totalorder %s16, 0
    %p43 = por %p41, %p42
    %s45 = sadd.s32 %s44, 1
    %p48 = scmp.eq.s32.totalorder %s10, 1
    %p49 = scmp.ne.s32.totalorder %s44, %s46
    %p50 = scmp.eq.s32.totalorder %s10, 0
    %p51 = por %p49, %p50
    %p52 = scmp.ne.s32.totalorder %s44, %s46
    %p53 = scmp.eq.s32.totalorder %s15, 1
    %p54 = por %p52, %p53
    %p55 = scmp.ne.s32.totalorder %s46, %s47
    %p56 = scmp.eq.s32.totalorder %s15, 0
    %p57 = por %p55, %p56
    %p58 = scmp.ne.s32.totalorder %s46, %s47
    %p59 = scmp.eq.s32.totalorder %s16, 1
    %p60 = por %p58, %p59
    %p62 = scmp.ne.s32.totalorder %s47, %s61
    %p63 = scmp.eq.s32.totalorder %s16, 0
    %p64 = por %p62, %p63
    %s66 = sadd.s32 %s65, 1
    %p69 = scmp.eq.s32.totalorder %s10, 1
    %p70 = scmp.ne.s32.totalorder %s65, %s67
    %p71 = scmp.eq.s32.totalorder %s10, 0
    %p72 = por %p70, %p71
    %p73 = scmp.ne.s32.totalorder %s65, %s67
    %p74 = scmp.eq.s32.totalorder %s15, 1
    %p75 = por %p73, %p74
    %p76 = scmp.ne.s32.totalorder %s67, %s68
    %p77 = scmp.eq.s32.totalorder %s15, 0
    %p78 = por %p76, %p77
    %p79 = scmp.ne.s32.totalorder %s67, %s68
    %p80 = scmp.eq.s32.totalorder %s16, 1
    %p81 = por %p79, %p80
    %p83 = scmp.ne.s32.totalorder %s68, %s82
    %p84 = scmp.eq.s32.totalorder %s16, 0
    %p85 = por %p83, %p84
    %s87 = sadd.s32 %s86, 1
    %p90 = scmp.eq.s32.totalorder %s10, 1
    %p91 = scmp.ne.s32.totalorder %s86, %s88
    %p92 = scmp.eq.s32.totalorder %s10, 0
    %p93 = por %p91, %p92
    %p94 = scmp.ne.s32.totalorder %s86, %s88
    %p95 = scmp.eq.s32.totalorder %s15, 1
    %p96 = por %p94, %p95
    %p97 = scmp.ne.s32.totalorder %s88, %s89
    %p98 = scmp.eq.s32.totalorder %s15, 0
    %p99 = por %p97, %p98
    %p100 = scmp.ne.s32.totalorder %s88, %s89
    %p101 = scmp.eq.s32.totalorder %s16, 1
    %p102 = por %p100, %p101
    %p104 = scmp.ne.s32.totalorder %s89, %s103
    %p105 = scmp.eq.s32.totalorder %s16, 0
    %p106 = por %p104, %p105
    %s107 = ssub.s32 %s10, %s17
    %p108 = scmp.eq.s32.totalorder %s107, 0
    %s110 = sadd.s32 %s109, 1
    %s111 = scalar_select %p108, %s109, %s110
    %p114 = pneg %p108
    %p115 = scmp.eq.s32.totalorder %s10, 1
    %p116 = por %p114, %p115
    %p117 = scmp.ne.s32.totalorder %s109, %s112
    %p118 = scmp.eq.s32.totalorder %s10, 0
    %p119 = por %p117, %p118
    %p120 = scmp.ne.s32.totalorder %s109, %s112
    %p121 = scmp.eq.s32.totalorder %s15, 1
    %p122 = por %p120, %p121
    %p123 = scmp.ne.s32.totalorder %s112, %s113
    %p124 = scmp.eq.s32.totalorder %s15, 0
    %p125 = por %p123, %p124
    %p126 = scmp.ne.s32.totalorder %s112, %s113
    %p127 = scmp.eq.s32.totalorder %s16, 1
    %p128 = por %p126, %p127
    %p130 = scmp.ne.s32.totalorder %s113, %s129
    %p131 = scmp.eq.s32.totalorder %s16, 0
    %p132 = por %p130, %p131
    %p133 = scmp.le.s32.totalorder 1, %s10
    %p134 = scmp.lt.s32.totalorder %s10, 3
    %p135 = pnand %p133, %p134
    %p136 = pneg %p135
    // Predicated region
    $region9: #{_lambda_.8} parent=5 // pred_check
      _
    $region10: #{_lambda_.8} parent=5 // pred_check_branch
      %138 = sbr.rel (%p135) target = $region12
    $region11: #{_lambda_.8} parent=5 // pred_region
      %s139 = ssub.s32 %s10, 1
      // Predicated region
      $region13: #{_lambda_.8} parent=11 // pred_check
        %p140 = pneg %p57
      $region14: #{_lambda_.8} parent=11 // pred_check_branch
        %142 = sbr.rel (%p140) target = $region16
      $region15: #{_lambda_.8} parent=11 // pred_region
        _
      $region16: #{_lambda_.8} parent=11 // pred_fallthru
        _
      // Predicated region
      $region17: #{_lambda_.8} parent=11 // pred_check
        %p143 = pneg %p78
      $region18: #{_lambda_.8} parent=11 // pred_check_branch
        %145 = sbr.rel (%p143) target = $region20
      $region19: #{_lambda_.8} parent=11 // pred_region
        _
      $region20: #{_lambda_.8} parent=11 // pred_fallthru
        _
      // Predicated region
      $region21: #{_lambda_.8} parent=11 // pred_check
        %p146 = pneg %p99
      $region22: #{_lambda_.8} parent=11 // pred_check_branch
        %148 = sbr.rel (%p146) target = $region24
      $region23: #{_lambda_.8} parent=11 // pred_region
        _
      $region24: #{_lambda_.8} parent=11 // pred_fallthru
        _
    $region12: #{_lambda_.8} parent=5 // pred_fallthru
      _
    %p149 = scmp.lt.s32.totalorder %s10, 2
    // Predicated region
    $region25: #{_lambda_.8} parent=5 // pred_check
      %p150 = pneg %p149
    $region26: #{_lambda_.8} parent=5 // pred_check_branch
      %152 = sbr.rel (%p150) target = $region28
    $region27: #{_lambda_.8} parent=5 // pred_region
      // Predicated region
      $region29: #{_lambda_.8} parent=27 // pred_check
        %p153 = pneg %p30
      $region30: #{_lambda_.8} parent=27 // pred_check_branch
        %155 = sbr.rel (%p153) target = $region32
      $region31: #{_lambda_.8} parent=27 // pred_region
        %p156 = scmp.lt.s32.totalorder %s10, 1
        %s157 = scalar_select %p156, %s10, 1
        %s158 = smul.addr %s157, 64
        %s159 = smul.addr %s158, 8
        %s160 = scalar_lea.vmem %s0, %s159
      $region32: #{_lambda_.8} parent=27 // pred_fallthru
        _
    $region28: #{_lambda_.8} parent=5 // pred_fallthru
      _
    %p161 = scmp.le.s32.totalorder 1, %s10
    %p162 = scmp.lt.s32.totalorder %s10, 3
    %p163 = pnand %p161, %p162
    %p164 = pneg %p163
    // Predicated region
    $region33: #{_lambda_.8} parent=5 // pred_check
      _
    $region34: #{_lambda_.8} parent=5 // pred_check_branch
      %166 = sbr.rel (%p163) target = $region36
    $region35: #{_lambda_.8} parent=5 // pred_region
      %s167 = ssub.s32 %s10, 1
      %p168 = scmp.lt.s32.totalorder %s15, 1
      %s169 = scalar_select %p168, %s15, 1
      %s170 = smul.addr %s169, 64
      %s171 = smul.addr %s170, 8
      %s172 = scalar_lea.vmem %s0, %s171
      %p173 = pneg %p36
      %p174 = pneg %p33
      %p175 = pneg %p57
      %p176 = pneg %p54
      %p177 = pneg %p78
      %p178 = pneg %p75
      %p179 = pneg %p99
      %p180 = pneg %p96
      %p181 = pneg %p125
      %p182 = pneg %p122
      %p183 = scmp.lt.s32.totalorder %s15, 1
      %s184 = scalar_select %p183, %s15, 1
      %s185 = smul.addr %s184, 8
      %s186 = smul.addr %s185, 8
      %s187 = scalar_lea.vmem %s4, %s186
      %p188 = scmp.lt.s32.totalorder %s15, 1
      %s189 = scalar_select %p188, %s15, 1
      %s190 = smul.addr %s189, 64
      %s191 = smul.addr %s190, 8
      %s192 = scalar_lea.vmem %s0, %s191
      %p193 = scmp.lt.s32.totalorder %s15, 1
      %s194 = scalar_select %p193, %s15, 1
      %s195 = smul.addr %s194, 8
      %s196 = smul.addr %s195, 8
      %s197 = scalar_lea.vmem %s4, %s196
      %v198 = vld [vmem:[%s1] sm:$0xff]
      %v199 = vld [vmem:[%s1 + $0x8] sm:$0xff]
      %v200 = vld [vmem:[%s1 + $0x10] sm:$0xff]
      %v201 = vld [vmem:[%s1 + $0x18] sm:$0xff]
      %v202 = vld [vmem:[%s1 + $0x20] sm:$0xff]
      %v203 = vld [vmem:[%s1 + $0x28] sm:$0xff]
      %v204 = vld [vmem:[%s1 + $0x30] sm:$0xff]
      %v205 = vld [vmem:[%s1 + $0x38] sm:$0xff]
      %v206 = vld [vmem:[%s1 + $0x40] sm:$0xff]
      %v207 = vld [vmem:[%s1 + $0x48] sm:$0xff]
      %v208 = vld [vmem:[%s1 + $0x50] sm:$0xff]
      %v209 = vld [vmem:[%s1 + $0x58] sm:$0xff]
      %v210 = vld [vmem:[%s1 + $0x60] sm:$0xff]
      %v211 = vld [vmem:[%s1 + $0x68] sm:$0xff]
      %v212 = vld [vmem:[%s1 + $0x70] sm:$0xff]
      %v213 = vld [vmem:[%s1 + $0x78] sm:$0xff]
      %v214 = vld [vmem:[%s1 + $0x80] sm:$0xff]
      %v215 = vld [vmem:[%s1 + $0x88] sm:$0xff]
      %v216 = vld [vmem:[%s1 + $0x90] sm:$0xff]
      %v217 = vld [vmem:[%s1 + $0x98] sm:$0xff]
      %v218 = vld [vmem:[%s1 + $0xa0] sm:$0xff]
      %v219 = vld [vmem:[%s1 + $0xa8] sm:$0xff]
      %v220 = vld [vmem:[%s1 + $0xb0] sm:$0xff]
      %v221 = vld [vmem:[%s1 + $0xb8] sm:$0xff]
      %v222 = vld [vmem:[%s1 + $0xc0] sm:$0xff]
      %v223 = vld [vmem:[%s1 + $0xc8] sm:$0xff]
      %v224 = vld [vmem:[%s1 + $0xd0] sm:$0xff]
      %v225 = vld [vmem:[%s1 + $0xd8] sm:$0xff]
      %v226 = vld [vmem:[%s1 + $0xe0] sm:$0xff]
      %v227 = vld [vmem:[%s1 + $0xe8] sm:$0xff]
      %v228 = vld [vmem:[%s1 + $0xf0] sm:$0xff]
      %v229 = vld [vmem:[%s1 + $0xf8] sm:$0xff]
      %v230 = vld [vmem:[%s192] sm:$0xff]
      %v231 = vld [vmem:[%s192 + $0x8] sm:$0xff]
      %v232 = vld [vmem:[%s192 + $0x10] sm:$0xff]
      %v233 = vld [vmem:[%s192 + $0x18] sm:$0xff]
      %v234 = vld [vmem:[%s192 + $0x20] sm:$0xff]
      %v235 = vld [vmem:[%s192 + $0x28] sm:$0xff]
      %v236 = vld [vmem:[%s192 + $0x30] sm:$0xff]
      %v237 = vld [vmem:[%s192 + $0x38] sm:$0xff]
      %v238 = vld [vmem:[%s192 + $0x40] sm:$0xff]
      %v239 = vld [vmem:[%s192 + $0x48] sm:$0xff]
      %v240 = vld [vmem:[%s192 + $0x50] sm:$0xff]
      %v241 = vld [vmem:[%s192 + $0x58] sm:$0xff]
      %v242 = vld [vmem:[%s192 + $0x60] sm:$0xff]
      %v243 = vld [vmem:[%s192 + $0x68] sm:$0xff]
      %v244 = vld [vmem:[%s192 + $0x70] sm:$0xff]
      %v245 = vld [vmem:[%s192 + $0x78] sm:$0xff]
      %v246 = vld [vmem:[%s192 + $0x80] sm:$0xff]
      %v247 = vld [vmem:[%s192 + $0x88] sm:$0xff]
      %v248 = vld [vmem:[%s192 + $0x90] sm:$0xff]
      %v249 = vld [vmem:[%s192 + $0x98] sm:$0xff]
      %v250 = vld [vmem:[%s192 + $0xa0] sm:$0xff]
      %v251 = vld [vmem:[%s192 + $0xa8] sm:$0xff]
      %v252 = vld [vmem:[%s192 + $0xb0] sm:$0xff]
      %v253 = vld [vmem:[%s192 + $0xb8] sm:$0xff]
      %v254 = vld [vmem:[%s192 + $0xc0] sm:$0xff]
      %v255 = vld [vmem:[%s192 + $0xc8] sm:$0xff]
      %v256 = vld [vmem:[%s192 + $0xd0] sm:$0xff]
      %v257 = vld [vmem:[%s192 + $0xd8] sm:$0xff]
      %v258 = vld [vmem:[%s192 + $0xe0] sm:$0xff]
      %v259 = vld [vmem:[%s192 + $0xe8] sm:$0xff]
      %v260 = vld [vmem:[%s192 + $0xf0] sm:$0xff]
      %v261 = vld [vmem:[%s192 + $0xf8] sm:$0xff]
      %v262 = vld [vmem:[%s192 + $0x100] sm:$0xff]
      %v263 = vld [vmem:[%s192 + $0x108] sm:$0xff]
      %v264 = vld [vmem:[%s192 + $0x110] sm:$0xff]
      %v265 = vld [vmem:[%s192 + $0x118] sm:$0xff]
      %v266 = vld [vmem:[%s192 + $0x120] sm:$0xff]
      %v267 = vld [vmem:[%s192 + $0x128] sm:$0xff]
      %v268 = vld [vmem:[%s192 + $0x130] sm:$0xff]
      %v269 = vld [vmem:[%s192 + $0x138] sm:$0xff]
      %v270 = vld [vmem:[%s192 + $0x140] sm:$0xff]
      %v271 = vld [vmem:[%s192 + $0x148] sm:$0xff]
      %v272 = vld [vmem:[%s192 + $0x150] sm:$0xff]
      %v273 = vld [vmem:[%s192 + $0x158] sm:$0xff]
      %v274 = vld [vmem:[%s192 + $0x160] sm:$0xff]
      %v275 = vld [vmem:[%s192 + $0x168] sm:$0xff]
      %v276 = vld [vmem:[%s192 + $0x170] sm:$0xff]
      %v277 = vld [vmem:[%s192 + $0x178] sm:$0xff]
      %v278 = vld [vmem:[%s192 + $0x180] sm:$0xff]
      %v279 = vld [vmem:[%s192 + $0x188] sm:$0xff]
      %v280 = vld [vmem:[%s192 + $0x190] sm:$0xff]
      %v281 = vld [vmem:[%s192 + $0x198] sm:$0xff]
      %v282 = vld [vmem:[%s192 + $0x1a0] sm:$0xff]
      %v283 = vld [vmem:[%s192 + $0x1a8] sm:$0xff]
      %v284 = vld [vmem:[%s192 + $0x1b0] sm:$0xff]
      %v285 = vld [vmem:[%s192 + $0x1b8] sm:$0xff]
      %v286 = vld [vmem:[%s192 + $0x1c0] sm:$0xff]
      %v287 = vld [vmem:[%s192 + $0x1c8] sm:$0xff]
      %v288 = vld [vmem:[%s192 + $0x1d0] sm:$0xff]
      %v289 = vld [vmem:[%s192 + $0x1d8] sm:$0xff]
      %v290 = vld [vmem:[%s192 + $0x1e0] sm:$0xff]
      %v291 = vld [vmem:[%s192 + $0x1e8] sm:$0xff]
      %v292 = vld [vmem:[%s192 + $0x1f0] sm:$0xff]
      %v293 = vld [vmem:[%s192 + $0x1f8] sm:$0xff]
      %294 = vmatprep.subr.mxu0 0.0
      %295 = vmatpush1.msra.mxu0 %v245
      %296 = vmatprep.subr.mxu0 0.0
      %297 = vmatpush1.msra.mxu0 %v244
      %298 = vmatprep.subr.mxu0 0.0
      %299 = vmatpush1.msra.mxu0 %v243
      %300 = vmatprep.subr.mxu0 0.0
      %301 = vmatpush1.msra.mxu0 %v242
      %302 = vmatprep.subr.mxu0 0.0
      %303 = vmatpush1.msra.mxu0 %v241
      %304 = vmatprep.subr.mxu0 0.0
      %305 = vmatpush1.msra.mxu0 %v240
      %306 = vmatprep.subr.mxu0 0.0
      %307 = vmatpush1.msra.mxu0 %v239
      %308 = vmatprep.subr.mxu0 0.0
      %309 = vmatpush1.msra.mxu0 %v238
      %310 = vmatprep.subr.mxu0 0.0
      %311 = vmatpush1.msra.mxu0 %v237
      %312 = vmatprep.subr.mxu0 0.0
      %313 = vmatpush1.msra.mxu0 %v236
      %314 = vmatprep.subr.mxu0 0.0
      %315 = vmatpush1.msra.mxu0 %v235
      %316 = vmatprep.subr.mxu0 0.0
      %317 = vmatpush1.msra.mxu0 %v234
      %318 = vmatprep.subr.mxu0 0.0
      %319 = vmatpush1.msra.mxu0 %v233
      %320 = vmatprep.subr.mxu0 0.0
      %321 = vmatpush1.msra.mxu0 %v232
      %322 = vmatprep.subr.mxu0 0.0
      %323 = vmatpush1.msra.mxu0 %v231
      %324 = vmatprep.subr.mxu0 0.0
      %325 = vmatpush1.msra.mxu0 %v230
      %326 = vmatprep.subr.mxu0 0.0
      %327 = vmatpush2.msra.mxu0 %v261
      %328 = vmatprep.subr.mxu0 0.0
      %329 = vmatpush2.msra.mxu0 %v260
      %330 = vmatprep.subr.mxu0 0.0
      %331 = vmatpush2.msra.mxu0 %v259
      %332 = vmatprep.subr.mxu0 0.0
      %333 = vmatpush2.msra.mxu0 %v258
      %334 = vmatprep.subr.mxu0 0.0
      %335 = vmatpush2.msra.mxu0 %v257
      %336 = vmatprep.subr.mxu0 0.0
      %337 = vmatpush2.msra.mxu0 %v256
      %338 = vmatprep.subr.mxu0 0.0
      %339 = vmatpush2.msra.mxu0 %v255
      %340 = vmatprep.subr.mxu0 0.0
      %341 = vmatpush2.msra.mxu0 %v254
      %342 = vmatprep.subr.mxu0 0.0
      %343 = vmatpush2.msra.mxu0 %v253
      %344 = vmatprep.subr.mxu0 0.0
      %345 = vmatpush2.msra.mxu0 %v252
      %346 = vmatprep.subr.mxu0 0.0
      %347 = vmatpush2.msra.mxu0 %v251
      %348 = vmatprep.subr.mxu0 0.0
      %349 = vmatpush2.msra.mxu0 %v250
      %350 = vmatprep.subr.mxu0 0.0
      %351 = vmatpush2.msra.mxu0 %v249
      %352 = vmatprep.subr.mxu0 0.0
      %353 = vmatpush2.msra.mxu0 %v248
      %354 = vmatprep.subr.mxu0 0.0
      %355 = vmatpush2.msra.mxu0 %v247
      %356 = vmatprep.subr.mxu0 0.0
      %357 = vmatpush2.msra.mxu0 %v246
      %358 = vmatprep.mubr.f32.mxu0 %v199
      %359 = vmatmul.mubr.f32.gmra.mxu0 %v198
      %v360 = vpop.f32.mrf.mxu0
      %v361 = vadd.f32 0.0, %v360
      %v362 = vpop.f32.mrf.mxu0
      %363 = vmatprep.mubr.f32.mxu0 %v203
      %364 = vmatmul.mubr.f32.gmra.mxu0 %v202
      %v365 = vpop.f32.mrf.mxu0
      %v366 = vadd.f32 0.0, %v365
      %v367 = vpop.f32.mrf.mxu0
      %368 = vmatprep.mubr.f32.mxu0 %v207
      %369 = vmatmul.mubr.f32.gmra.mxu0 %v206
      %v370 = vpop.f32.mrf.mxu0
      %v371 = vadd.f32 0.0, %v370
      %v372 = vpop.f32.mrf.mxu0
      %373 = vmatprep.mubr.f32.mxu0 %v211
      %374 = vmatmul.mubr.f32.gmra.mxu0 %v210
      %v375 = vpop.f32.mrf.mxu0
      %v376 = vadd.f32 0.0, %v375
      %v377 = vpop.f32.mrf.mxu0
      %378 = vmatprep.mubr.f32.mxu0 %v215
      %379 = vmatmul.mubr.f32.gmra.mxu0 %v214
      %v380 = vpop.f32.mrf.mxu0
      %v381 = vadd.f32 0.0, %v380
      %v382 = vpop.f32.mrf.mxu0
      %383 = vmatprep.mubr.f32.mxu0 %v219
      %384 = vmatmul.mubr.f32.gmra.mxu0 %v218
      %v385 = vpop.f32.mrf.mxu0
      %v386 = vadd.f32 0.0, %v385
      %v387 = vpop.f32.mrf.mxu0
      %388 = vmatprep.mubr.f32.mxu0 %v223
      %389 = vmatmul.mubr.f32.gmra.mxu0 %v222
      %v390 = vpop.f32.mrf.mxu0
      %v391 = vadd.f32 0.0, %v390
      %v392 = vpop.f32.mrf.mxu0
      %393 = vmatprep.mubr.f32.mxu0 %v227
      %394 = vmatmul.mubr.f32.gmra.mxu0 %v226
      %v395 = vpop.f32.mrf.mxu0
      %v396 = vadd.f32 0.0, %v395
      %v397 = vpop.f32.mrf.mxu0
      %398 = vdwg.mxu0
      %399 = vmatprep.subr.mxu0 0.0
      %400 = vmatpush1.msra.mxu0 %v277
      %401 = vmatprep.subr.mxu0 0.0
      %402 = vmatpush1.msra.mxu0 %v276
      %403 = vmatprep.subr.mxu0 0.0
      %404 = vmatpush1.msra.mxu0 %v275
      %405 = vmatprep.subr.mxu0 0.0
      %406 = vmatpush1.msra.mxu0 %v274
      %407 = vmatprep.subr.mxu0 0.0
      %408 = vmatpush1.msra.mxu0 %v273
      %409 = vmatprep.subr.mxu0 0.0
      %410 = vmatpush1.msra.mxu0 %v272
      %411 = vmatprep.subr.mxu0 0.0
      %412 = vmatpush1.msra.mxu0 %v271
      %413 = vmatprep.subr.mxu0 0.0
      %414 = vmatpush1.msra.mxu0 %v270
      %415 = vmatprep.subr.mxu0 0.0
      %416 = vmatpush1.msra.mxu0 %v269
      %417 = vmatprep.subr.mxu0 0.0
      %418 = vmatpush1.msra.mxu0 %v268
      %419 = vmatprep.subr.mxu0 0.0
      %420 = vmatpush1.msra.mxu0 %v267
      %421 = vmatprep.subr.mxu0 0.0
      %422 = vmatpush1.msra.mxu0 %v266
      %423 = vmatprep.subr.mxu0 0.0
      %424 = vmatpush1.msra.mxu0 %v265
      %425 = vmatprep.subr.mxu0 0.0
      %426 = vmatpush1.msra.mxu0 %v264
      %427 = vmatprep.subr.mxu0 0.0
      %428 = vmatpush1.msra.mxu0 %v263
      %429 = vmatprep.subr.mxu0 0.0
      %430 = vmatpush1.msra.mxu0 %v262
      %431 = vmatprep.subr.mxu0 0.0
      %432 = vmatpush2.msra.mxu0 %v293
      %433 = vmatprep.subr.mxu0 0.0
      %434 = vmatpush2.msra.mxu0 %v292
      %435 = vmatprep.subr.mxu0 0.0
      %436 = vmatpush2.msra.mxu0 %v291
      %437 = vmatprep.subr.mxu0 0.0
      %438 = vmatpush2.msra.mxu0 %v290
      %439 = vmatprep.subr.mxu0 0.0
      %440 = vmatpush2.msra.mxu0 %v289
      %441 = vmatprep.subr.mxu0 0.0
      %442 = vmatpush2.msra.mxu0 %v288
      %443 = vmatprep.subr.mxu0 0.0
      %444 = vmatpush2.msra.mxu0 %v287
      %445 = vmatprep.subr.mxu0 0.0
      %446 = vmatpush2.msra.mxu0 %v286
      %447 = vmatprep.subr.mxu0 0.0
      %448 = vmatpush2.msra.mxu0 %v285
      %449 = vmatprep.subr.mxu0 0.0
      %450 = vmatpush2.msra.mxu0 %v284
      %451 = vmatprep.subr.mxu0 0.0
      %452 = vmatpush2.msra.mxu0 %v283
      %453 = vmatprep.subr.mxu0 0.0
      %454 = vmatpush2.msra.mxu0 %v282
      %455 = vmatprep.subr.mxu0 0.0
      %456 = vmatpush2.msra.mxu0 %v281
      %457 = vmatprep.subr.mxu0 0.0
      %458 = vmatpush2.msra.mxu0 %v280
      %459 = vmatprep.subr.mxu0 0.0
      %460 = vmatpush2.msra.mxu0 %v279
      %461 = vmatprep.subr.mxu0 0.0
      %462 = vmatpush2.msra.mxu0 %v278
      %463 = vmatprep.mubr.f32.mxu0 %v201
      %464 = vmatmul.mubr.f32.gmra.mxu0 %v200
      %v465 = vpop.f32.mrf.mxu0
      %v466 = vadd.f32 %v361, %v465
      %v467 = vpop.f32.mrf.mxu0
      %468 = vmatprep.mubr.f32.mxu0 %v205
      %469 = vmatmul.mubr.f32.gmra.mxu0 %v204
      %v470 = vpop.f32.mrf.mxu0
      %v471 = vadd.f32 %v366, %v470
      %v472 = vpop.f32.mrf.mxu0
      %473 = vmatprep.mubr.f32.mxu0 %v209
      %474 = vmatmul.mubr.f32.gmra.mxu0 %v208
      %v475 = vpop.f32.mrf.mxu0
      %v476 = vadd.f32 %v371, %v475
      %v477 = vpop.f32.mrf.mxu0
      %478 = vmatprep.mubr.f32.mxu0 %v213
      %479 = vmatmul.mubr.f32.gmra.mxu0 %v212
      %v480 = vpop.f32.mrf.mxu0
      %v481 = vadd.f32 %v376, %v480
      %v482 = vpop.f32.mrf.mxu0
      %483 = vmatprep.mubr.f32.mxu0 %v217
      %484 = vmatmul.mubr.f32.gmra.mxu0 %v216
      %v485 = vpop.f32.mrf.mxu0
      %v486 = vadd.f32 %v381, %v485
      %v487 = vpop.f32.mrf.mxu0
      %488 = vmatprep.mubr.f32.mxu0 %v221
      %489 = vmatmul.mubr.f32.gmra.mxu0 %v220
      %v490 = vpop.f32.mrf.mxu0
      %v491 = vadd.f32 %v386, %v490
      %v492 = vpop.f32.mrf.mxu0
      %493 = vmatprep.mubr.f32.mxu0 %v225
      %494 = vmatmul.mubr.f32.gmra.mxu0 %v224
      %v495 = vpop.f32.mrf.mxu0
      %v496 = vadd.f32 %v391, %v495
      %v497 = vpop.f32.mrf.mxu0
      %498 = vmatprep.mubr.f32.mxu0 %v229
      %499 = vmatmul.mubr.f32.gmra.mxu0 %v228
      %v500 = vpop.f32.mrf.mxu0
      %v501 = vadd.f32 %v396, %v500
      %v502 = vpop.f32.mrf.mxu0
      %503 = vdwg.mxu0
      %v504 = vld [vmem:[%s2] sm:$0xff]
      %v505 = vld [vmem:[%s2 + $0x8] sm:$0xff]
      %v506 = vld [vmem:[%s2 + $0x10] sm:$0xff]
      %v507 = vld [vmem:[%s2 + $0x18] sm:$0xff]
      %v508 = vld [vmem:[%s2 + $0x20] sm:$0xff]
      %v509 = vld [vmem:[%s2 + $0x28] sm:$0xff]
      %v510 = vld [vmem:[%s2 + $0x30] sm:$0xff]
      %v511 = vld [vmem:[%s2 + $0x38] sm:$0xff]
      %513 = vset.pattern.permute.xlu0 0
      %514 = vperm.xlu0 %513, %v504
      %v515 = vpop.permute.xlu0 %514
      %518 = vset.pattern.permute.xlu0 0
      %519 = vperm.xlu0 %518, %v505
      %v520 = vpop.permute.xlu0 %519
      %523 = vset.pattern.permute.xlu0 0
      %524 = vperm.xlu0 %523, %v506
      %v525 = vpop.permute.xlu0 %524
      %528 = vset.pattern.permute.xlu0 0
      %529 = vperm.xlu0 %528, %v507
      %v530 = vpop.permute.xlu0 %529
      %533 = vset.pattern.permute.xlu0 0
      %534 = vperm.xlu0 %533, %v508
      %v535 = vpop.permute.xlu0 %534
      %538 = vset.pattern.permute.xlu0 0
      %539 = vperm.xlu0 %538, %v509
      %v540 = vpop.permute.xlu0 %539
      %543 = vset.pattern.permute.xlu0 0
      %544 = vperm.xlu0 %543, %v510
      %v545 = vpop.permute.xlu0 %544
      %548 = vset.pattern.permute.xlu0 0
      %549 = vperm.xlu0 %548, %v511
      %v550 = vpop.permute.xlu0 %549
      %v552 = vmul.f32 %v466, %v515
      %v553 = vmul.f32 %v471, %v520
      %v554 = vmul.f32 %v476, %v525
      %v555 = vmul.f32 %v481, %v530
      %v556 = vmul.f32 %v486, %v535
      %v557 = vmul.f32 %v491, %v540
      %v558 = vmul.f32 %v496, %v545
      %v559 = vmul.f32 %v501, %v550
      %v560 = vld [vmem:[%s3] sm:$0xff]
      %v561 = vld [vmem:[%s3 + $0x8] sm:$0xff]
      %v562 = vld [vmem:[%s3 + $0x10] sm:$0xff]
      %v563 = vld [vmem:[%s3 + $0x18] sm:$0xff]
      %v564 = vld [vmem:[%s3 + $0x20] sm:$0xff]
      %v565 = vld [vmem:[%s3 + $0x28] sm:$0xff]
      %v566 = vld [vmem:[%s3 + $0x30] sm:$0xff]
      %v567 = vld [vmem:[%s3 + $0x38] sm:$0xff]
      %569 = vset.pattern.permute.xlu0 0
      %570 = vperm.xlu0 %569, %v560
      %v571 = vpop.permute.xlu0 %570
      %574 = vset.pattern.permute.xlu0 0
      %575 = vperm.xlu0 %574, %v561
      %v576 = vpop.permute.xlu0 %575
      %579 = vset.pattern.permute.xlu0 0
      %580 = vperm.xlu0 %579, %v562
      %v581 = vpop.permute.xlu0 %580
      %584 = vset.pattern.permute.xlu0 0
      %585 = vperm.xlu0 %584, %v563
      %v586 = vpop.permute.xlu0 %585
      %589 = vset.pattern.permute.xlu0 0
      %590 = vperm.xlu0 %589, %v564
      %v591 = vpop.permute.xlu0 %590
      %594 = vset.pattern.permute.xlu0 0
      %595 = vperm.xlu0 %594, %v565
      %v596 = vpop.permute.xlu0 %595
      %599 = vset.pattern.permute.xlu0 0
      %600 = vperm.xlu0 %599, %v566
      %v601 = vpop.permute.xlu0 %600
      %604 = vset.pattern.permute.xlu0 0
      %605 = vperm.xlu0 %604, %v567
      %v606 = vpop.permute.xlu0 %605
      %v608 = vadd.f32 %v552, %v571
      %v609 = vadd.f32 %v553, %v576
      %v610 = vadd.f32 %v554, %v581
      %v611 = vadd.f32 %v555, %v586
      %v612 = vadd.f32 %v556, %v591
      %v613 = vadd.f32 %v557, %v596
      %v614 = vadd.f32 %v558, %v601
      %v615 = vadd.f32 %v559, %v606
      %vm616 = vcmp.ge.f32.partialorder %v608, 0.0
      %vm617 = vcmp.ge.f32.partialorder %v609, 0.0
      %vm618 = vcmp.ge.f32.partialorder %v610, 0.0
      %vm619 = vcmp.ge.f32.partialorder %v611, 0.0
      %vm620 = vcmp.ge.f32.partialorder %v612, 0.0
      %vm621 = vcmp.ge.f32.partialorder %v613, 0.0
      %vm622 = vcmp.ge.f32.partialorder %v614, 0.0
      %vm623 = vcmp.ge.f32.partialorder %v615, 0.0
      %v624 = vmul.f32 %v608, 0.2
      %v625 = vmul.f32 %v609, 0.2
      %v626 = vmul.f32 %v610, 0.2
      %v627 = vmul.f32 %v611, 0.2
      %v628 = vmul.f32 %v612, 0.2
      %v629 = vmul.f32 %v613, 0.2
      %v630 = vmul.f32 %v614, 0.2
      %v631 = vmul.f32 %v615, 0.2
      %v632 = vsel %vm616, %v608, %v624
      %v633 = vsel %vm617, %v609, %v625
      %v634 = vsel %vm618, %v610, %v626
      %v635 = vsel %vm619, %v611, %v627
      %v636 = vsel %vm620, %v612, %v628
      %v637 = vsel %vm621, %v613, %v629
      %v638 = vsel %vm622, %v614, %v630
      %v639 = vsel %vm623, %v615, %v631
      %vm640 = vcmask 72704
      %641 = vst.msk [vmem:[%s197] sm:$0xff] %vm640, %v632
      %642 = vst.msk [vmem:[%s197 + $0x8] sm:$0xff] %vm640, %v633
      %643 = vst.msk [vmem:[%s197 + $0x10] sm:$0xff] %vm640, %v634
      %644 = vst.msk [vmem:[%s197 + $0x18] sm:$0xff] %vm640, %v635
      %645 = vst.msk [vmem:[%s197 + $0x20] sm:$0xff] %vm640, %v636
      %646 = vst.msk [vmem:[%s197 + $0x28] sm:$0xff] %vm640, %v637
      %647 = vst.msk [vmem:[%s197 + $0x30] sm:$0xff] %vm640, %v638
      %648 = vst.msk [vmem:[%s197 + $0x38] sm:$0xff] %vm640, %v639
      %p649 = scmp.lt.s32.totalorder %s15, 1
      %s650 = scalar_select %p649, %s15, 1
      %s651 = smul.addr %s650, 8
      %s652 = smul.addr %s651, 8
      %s653 = scalar_lea.vmem %s4, %s652
      // Predicated region
      $region37: #{_lambda_.8} parent=35 // pred_check
        %p654 = pneg %p122
      $region38: #{_lambda_.8} parent=35 // pred_check_branch
        %656 = sbr.rel (%p654) target = $region40
      $region39: #{_lambda_.8} parent=35 // pred_region
        _
      $region40: #{_lambda_.8} parent=35 // pred_fallthru
        _
    $region36: #{_lambda_.8} parent=5 // pred_fallthru
      _
    %p657 = scmp.le.s32.totalorder 2, %s10
    // Predicated region
    $region41: #{_lambda_.8} parent=5 // pred_check
      %p658 = pneg %p657
    $region42: #{_lambda_.8} parent=5 // pred_check_branch
      %660 = sbr.rel (%p658) target = $region44
    $region43: #{_lambda_.8} parent=5 // pred_region
      %s661 = ssub.s32 %s10, 2
      // Predicated region
      $region45: #{_lambda_.8} parent=43 // pred_check
        %p662 = pneg %p128
      $region46: #{_lambda_.8} parent=43 // pred_check_branch
        %664 = sbr.rel (%p662) target = $region48
      $region47: #{_lambda_.8} parent=43 // pred_region
        %p665 = scmp.lt.s32.totalorder %s16, 1
        %s666 = scalar_select %p665, %s16, 1
        %s667 = smul.addr %s666, 8
        %s668 = smul.addr %s667, 8
        %s669 = scalar_lea.vmem %s4, %s668
      $region48: #{_lambda_.8} parent=43 // pred_fallthru
        _
    $region44: #{_lambda_.8} parent=5 // pred_fallthru
      _
  $region6: #{_lambda_.8} parent=0 // loop_footer
    %s14 = sadd.s32 1, %s10
  $region7: #{_lambda_.8} parent=0 // loop_footer_branch
    %9 = sbr.rel target = $region3
  $region8: #{_lambda_.8} parent=0 // loop_exit
    _

// kernel: _lambda_.9
$region0: #{_lambda_.9}
  #allocation0 [shape = 'u32[]', space=smem, size = 0x4, offset = 0x4, fixed_abs, tag = 'smem constant byte address 0x4 - core index']
  #allocation1 [shape = 'u32[144,128]{1,0:T(1,128)}', space=vmem, size = 0x12000, scoped, tag = 'internal scratch']
  #allocation2 [shape = 'f32[1,1]{1,0:T(1,128)S(1)}', space=vmem, size = 0x200, scoped, tag = 'scoped memory for _lambda_.9']
  #allocation3 [shape = 'f32[1,1]{1,0:T(1,128)S(1)}', space=vmem, size = 0x200, scoped, tag = 'scoped memory for _lambda_.9']
  %s0 = inlined_call_operand.vmem [shape: f32[2,1024,4], index: 0, kind: input, shape index: {}]
  %s1 = inlined_call_operand.vmem [shape: f32[1,1024], index: 1, kind: input, shape index: {}]
  %s2 = inlined_call_operand.<no memory space> [shape: f32[1,1], index: 2, kind: input, shape index: {}]
  %s3 = inlined_call_operand.<no memory space> [shape: f32[1,1], index: 3, kind: input, shape index: {}]
  %s4 = inlined_call_operand.vmem [shape: f32[2,1,4], index: 4, kind: output, shape index: {}]
  %s5 = sld [smem:[#allocation0]]
  $region49: #{_lambda_.9} parent=0
    _
  %s7 = ssub.s32 1, %s5
  %s8 = scalar_select 0, %s7, %s5
  %v9 = vstv %s2
  %10 = vst [vmem:[#allocation2] sm:$0x1] %v9
  %v11 = vstv %s3
  %12 = vst [vmem:[#allocation3] sm:$0x1] %v11
  loop: start=0, step=1, limit=4
  $region2: #{_lambda_.9} parent=0 // loop_pre_header
    _
  $region3: #{_lambda_.9} parent=0 // loop_header
    %s14 = sphi 0, %s18
    %p15 = scmp.ge.s32.totalorder %s14, 4
    %s24 = sphi 0, %s26
    %s27 = sphi 0, %s24
    %s28 = sphi 0, %s27
    %s44 = sphi 0, %s28
    %s48 = sphi 0, %s48
    %s50 = sphi 0, %s48
    %s51 = sphi 0, %s50
    %s65 = sphi 0, %s51
    %s69 = sphi 0, %s69
    %s71 = sphi 0, %s69
    %s72 = sphi 0, %s71
    %s86 = sphi 0, %s72
    %s90 = sphi 0, %s90
    %s92 = sphi 0, %s90
    %s93 = sphi 0, %s92
    %s107 = sphi 0, %s93
    %s113 = sphi 0, %s115
    %s116 = sphi 0, %s113
    %s117 = sphi 0, %s116
    %s133 = sphi 0, %s117
  $region4: #{_lambda_.9} parent=0 // loop_header_branch
    %17 = sbr.rel (%p15) target = $region8
  $region5: #{_lambda_.9} parent=0 // loop_body
    %s19 = ssub.s32 %s14, 1
    %s20 = ssub.s32 %s14, 2
    %s21 = sadd.s32 %s14, 1
    %s22 = ssub.s32 %s14, %s21
    %p23 = scmp.eq.s32.totalorder %s22, 0
    %s25 = sadd.s32 %s24, 1
    %s26 = scalar_select %p23, %s24, %s25
    %p29 = pneg %p23
    %p30 = scmp.eq.s32.totalorder %s14, 1
    %p31 = por %p29, %p30
    %p32 = scmp.ne.s32.totalorder %s24, %s27
    %p33 = scmp.eq.s32.totalorder %s14, 0
    %p34 = por %p32, %p33
    %p35 = scmp.ne.s32.totalorder %s24, %s27
    %p36 = scmp.eq.s32.totalorder %s19, 1
    %p37 = por %p35, %p36
    %p38 = scmp.ne.s32.totalorder %s27, %s28
    %p39 = scmp.eq.s32.totalorder %s19, 0
    %p40 = por %p38, %p39
    %p41 = scmp.ne.s32.totalorder %s27, %s28
    %p42 = scmp.eq.s32.totalorder %s20, 1
    %p43 = por %p41, %p42
    %p45 = scmp.ne.s32.totalorder %s28, %s44
    %p46 = scmp.eq.s32.totalorder %s20, 0
    %p47 = por %p45, %p46
    %s49 = sadd.s32 %s48, 1
    %p52 = scmp.eq.s32.totalorder %s14, 1
    %p53 = scmp.ne.s32.totalorder %s48, %s50
    %p54 = scmp.eq.s32.totalorder %s14, 0
    %p55 = por %p53, %p54
    %p56 = scmp.ne.s32.totalorder %s48, %s50
    %p57 = scmp.eq.s32.totalorder %s19, 1
    %p58 = por %p56, %p57
    %p59 = scmp.ne.s32.totalorder %s50, %s51
    %p60 = scmp.eq.s32.totalorder %s19, 0
    %p61 = por %p59, %p60
    %p62 = scmp.ne.s32.totalorder %s50, %s51
    %p63 = scmp.eq.s32.totalorder %s20, 1
    %p64 = por %p62, %p63
    %p66 = scmp.ne.s32.totalorder %s51, %s65
    %p67 = scmp.eq.s32.totalorder %s20, 0
    %p68 = por %p66, %p67
    %s70 = sadd.s32 %s69, 1
    %p73 = scmp.eq.s32.totalorder %s14, 1
    %p74 = scmp.ne.s32.totalorder %s69, %s71
    %p75 = scmp.eq.s32.totalorder %s14, 0
    %p76 = por %p74, %p75
    %p77 = scmp.ne.s32.totalorder %s69, %s71
    %p78 = scmp.eq.s32.totalorder %s19, 1
    %p79 = por %p77, %p78
    %p80 = scmp.ne.s32.totalorder %s71, %s72
    %p81 = scmp.eq.s32.totalorder %s19, 0
    %p82 = por %p80, %p81
    %p83 = scmp.ne.s32.totalorder %s71, %s72
    %p84 = scmp.eq.s32.totalorder %s20, 1
    %p85 = por %p83, %p84
    %p87 = scmp.ne.s32.totalorder %s72, %s86
    %p88 = scmp.eq.s32.totalorder %s20, 0
    %p89 = por %p87, %p88
    %s91 = sadd.s32 %s90, 1
    %p94 = scmp.eq.s32.totalorder %s14, 1
    %p95 = scmp.ne.s32.totalorder %s90, %s92
    %p96 = scmp.eq.s32.totalorder %s14, 0
    %p97 = por %p95, %p96
    %p98 = scmp.ne.s32.totalorder %s90, %s92
    %p99 = scmp.eq.s32.totalorder %s19, 1
    %p100 = por %p98, %p99
    %p101 = scmp.ne.s32.totalorder %s92, %s93
    %p102 = scmp.eq.s32.totalorder %s19, 0
    %p103 = por %p101, %p102
    %p104 = scmp.ne.s32.totalorder %s92, %s93
    %p105 = scmp.eq.s32.totalorder %s20, 1
    %p106 = por %p104, %p105
    %p108 = scmp.ne.s32.totalorder %s93, %s107
    %p109 = scmp.eq.s32.totalorder %s20, 0
    %p110 = por %p108, %p109
    %s111 = ssub.s32 %s14, %s21
    %p112 = scmp.eq.s32.totalorder %s111, 0
    %s114 = sadd.s32 %s113, 1
    %s115 = scalar_select %p112, %s113, %s114
    %p118 = pneg %p112
    %p119 = scmp.eq.s32.totalorder %s14, 1
    %p120 = por %p118, %p119
    %p121 = scmp.ne.s32.totalorder %s113, %s116
    %p122 = scmp.eq.s32.totalorder %s14, 0
    %p123 = por %p121, %p122
    %p124 = scmp.ne.s32.totalorder %s113, %s116
    %p125 = scmp.eq.s32.totalorder %s19, 1
    %p126 = por %p124, %p125
    %p127 = scmp.ne.s32.totalorder %s116, %s117
    %p128 = scmp.eq.s32.totalorder %s19, 0
    %p129 = por %p127, %p128
    %p130 = scmp.ne.s32.totalorder %s116, %s117
    %p131 = scmp.eq.s32.totalorder %s20, 1
    %p132 = por %p130, %p131
    %p134 = scmp.ne.s32.totalorder %s117, %s133
    %p135 = scmp.eq.s32.totalorder %s20, 0
    %p136 = por %p134, %p135
    %p137 = scmp.le.s32.totalorder 1, %s14
    %p138 = scmp.lt.s32.totalorder %s14, 3
    %p139 = pnand %p137, %p138
    %p140 = pneg %p139
    // Predicated region
    $region9: #{_lambda_.9} parent=5 // pred_check
      _
    $region10: #{_lambda_.9} parent=5 // pred_check_branch
      %142 = sbr.rel (%p139) target = $region12
    $region11: #{_lambda_.9} parent=5 // pred_region
      %s143 = ssub.s32 %s14, 1
      // Predicated region
      $region13: #{_lambda_.9} parent=11 // pred_check
        %p144 = pneg %p61
      $region14: #{_lambda_.9} parent=11 // pred_check_branch
        %146 = sbr.rel (%p144) target = $region16
      $region15: #{_lambda_.9} parent=11 // pred_region
        _
      $region16: #{_lambda_.9} parent=11 // pred_fallthru
        _
      // Predicated region
      $region17: #{_lambda_.9} parent=11 // pred_check
        %p147 = pneg %p82
      $region18: #{_lambda_.9} parent=11 // pred_check_branch
        %149 = sbr.rel (%p147) target = $region20
      $region19: #{_lambda_.9} parent=11 // pred_region
        _
      $region20: #{_lambda_.9} parent=11 // pred_fallthru
        _
      // Predicated region
      $region21: #{_lambda_.9} parent=11 // pred_check
        %p150 = pneg %p103
      $region22: #{_lambda_.9} parent=11 // pred_check_branch
        %152 = sbr.rel (%p150) target = $region24
      $region23: #{_lambda_.9} parent=11 // pred_region
        _
      $region24: #{_lambda_.9} parent=11 // pred_fallthru
        _
    $region12: #{_lambda_.9} parent=5 // pred_fallthru
      _
    %p153 = scmp.lt.s32.totalorder %s14, 2
    // Predicated region
    $region25: #{_lambda_.9} parent=5 // pred_check
      %p154 = pneg %p153
    $region26: #{_lambda_.9} parent=5 // pred_check_branch
      %156 = sbr.rel (%p154) target = $region28
    $region27: #{_lambda_.9} parent=5 // pred_region
      // Predicated region
      $region29: #{_lambda_.9} parent=27 // pred_check
        %p157 = pneg %p34
      $region30: #{_lambda_.9} parent=27 // pred_check_branch
        %159 = sbr.rel (%p157) target = $region32
      $region31: #{_lambda_.9} parent=27 // pred_region
        %p160 = scmp.lt.s32.totalorder %s14, 1
        %s161 = scalar_select %p160, %s14, 1
        %s162 = smul.addr %s161, 128
        %s163 = smul.addr %s162, 8
        %s164 = scalar_lea.vmem %s0, %s163
      $region32: #{_lambda_.9} parent=27 // pred_fallthru
        _
    $region28: #{_lambda_.9} parent=5 // pred_fallthru
      _
    %p165 = scmp.le.s32.totalorder 1, %s14
    %p166 = scmp.lt.s32.totalorder %s14, 3
    %p167 = pnand %p165, %p166
    %p168 = pneg %p167
    // Predicated region
    $region33: #{_lambda_.9} parent=5 // pred_check
      _
    $region34: #{_lambda_.9} parent=5 // pred_check_branch
      %170 = sbr.rel (%p167) target = $region36
    $region35: #{_lambda_.9} parent=5 // pred_region
      %s171 = ssub.s32 %s14, 1
      %p172 = scmp.lt.s32.totalorder %s19, 1
      %s173 = scalar_select %p172, %s19, 1
      %s174 = smul.addr %s173, 128
      %s175 = smul.addr %s174, 8
      %s176 = scalar_lea.vmem %s0, %s175
      %p177 = pneg %p40
      %p178 = pneg %p37
      %p179 = pneg %p61
      %p180 = pneg %p58
      %p181 = pneg %p82
      %p182 = pneg %p79
      %p183 = pneg %p103
      %p184 = pneg %p100
      %p185 = pneg %p129
      %p186 = pneg %p126
      %p187 = scmp.lt.s32.totalorder %s19, 1
      %s188 = scalar_select %p187, %s19, 1
      %s189 = scalar_lea.vmem %s4, %s188
      %p190 = scmp.lt.s32.totalorder %s19, 1
      %s191 = scalar_select %p190, %s19, 1
      %s192 = smul.addr %s191, 128
      %s193 = smul.addr %s192, 8
      %s194 = scalar_lea.vmem %s0, %s193
      %p195 = scmp.lt.s32.totalorder %s19, 1
      %s196 = scalar_select %p195, %s19, 1
      %s197 = scalar_lea.vmem %s4, %s196
      %v198 = vld [vmem:[%s1] sm:$0xff]
      %v199 = vld [vmem:[%s194] sm:$0xff]
      %v200 = vld [vmem:[%s194 + $0x8] sm:$0xff]
      %v201 = vld [vmem:[%s194 + $0x10] sm:$0xff]
      %v202 = vld [vmem:[%s194 + $0x18] sm:$0xff]
      %v203 = vld [vmem:[%s194 + $0x20] sm:$0xff]
      %v204 = vld [vmem:[%s194 + $0x28] sm:$0xff]
      %v205 = vld [vmem:[%s194 + $0x30] sm:$0xff]
      %v206 = vld [vmem:[%s194 + $0x38] sm:$0xff]
      %v207 = vld [vmem:[%s194 + $0x40] sm:$0xff]
      %v208 = vld [vmem:[%s194 + $0x48] sm:$0xff]
      %v209 = vld [vmem:[%s194 + $0x50] sm:$0xff]
      %v210 = vld [vmem:[%s194 + $0x58] sm:$0xff]
      %v211 = vld [vmem:[%s194 + $0x60] sm:$0xff]
      %v212 = vld [vmem:[%s194 + $0x68] sm:$0xff]
      %v213 = vld [vmem:[%s194 + $0x70] sm:$0xff]
      %v214 = vld [vmem:[%s194 + $0x78] sm:$0xff]
      %v215 = vld [vmem:[%s194 + $0x80] sm:$0xff]
      %v216 = vld [vmem:[%s194 + $0x88] sm:$0xff]
      %v217 = vld [vmem:[%s194 + $0x90] sm:$0xff]
      %v218 = vld [vmem:[%s194 + $0x98] sm:$0xff]
      %v219 = vld [vmem:[%s194 + $0xa0] sm:$0xff]
      %v220 = vld [vmem:[%s194 + $0xa8] sm:$0xff]
      %v221 = vld [vmem:[%s194 + $0xb0] sm:$0xff]
      %v222 = vld [vmem:[%s194 + $0xb8] sm:$0xff]
      %v223 = vld [vmem:[%s194 + $0xc0] sm:$0xff]
      %v224 = vld [vmem:[%s194 + $0xc8] sm:$0xff]
      %v225 = vld [vmem:[%s194 + $0xd0] sm:$0xff]
      %v226 = vld [vmem:[%s194 + $0xd8] sm:$0xff]
      %v227 = vld [vmem:[%s194 + $0xe0] sm:$0xff]
      %v228 = vld [vmem:[%s194 + $0xe8] sm:$0xff]
      %v229 = vld [vmem:[%s194 + $0xf0] sm:$0xff]
      %v230 = vld [vmem:[%s194 + $0xf8] sm:$0xff]
      %v231 = vld [vmem:[%s194 + $0x100] sm:$0xff]
      %v232 = vld [vmem:[%s194 + $0x108] sm:$0xff]
      %v233 = vld [vmem:[%s194 + $0x110] sm:$0xff]
      %v234 = vld [vmem:[%s194 + $0x118] sm:$0xff]
      %v235 = vld [vmem:[%s194 + $0x120] sm:$0xff]
      %v236 = vld [vmem:[%s194 + $0x128] sm:$0xff]
      %v237 = vld [vmem:[%s194 + $0x130] sm:$0xff]
      %v238 = vld [vmem:[%s194 + $0x138] sm:$0xff]
      %v239 = vld [vmem:[%s194 + $0x140] sm:$0xff]
      %v240 = vld [vmem:[%s194 + $0x148] sm:$0xff]
      %v241 = vld [vmem:[%s194 + $0x150] sm:$0xff]
      %v242 = vld [vmem:[%s194 + $0x158] sm:$0xff]
      %v243 = vld [vmem:[%s194 + $0x160] sm:$0xff]
      %v244 = vld [vmem:[%s194 + $0x168] sm:$0xff]
      %v245 = vld [vmem:[%s194 + $0x170] sm:$0xff]
      %v246 = vld [vmem:[%s194 + $0x178] sm:$0xff]
      %v247 = vld [vmem:[%s194 + $0x180] sm:$0xff]
      %v248 = vld [vmem:[%s194 + $0x188] sm:$0xff]
      %v249 = vld [vmem:[%s194 + $0x190] sm:$0xff]
      %v250 = vld [vmem:[%s194 + $0x198] sm:$0xff]
      %v251 = vld [vmem:[%s194 + $0x1a0] sm:$0xff]
      %v252 = vld [vmem:[%s194 + $0x1a8] sm:$0xff]
      %v253 = vld [vmem:[%s194 + $0x1b0] sm:$0xff]
      %v254 = vld [vmem:[%s194 + $0x1b8] sm:$0xff]
      %v255 = vld [vmem:[%s194 + $0x1c0] sm:$0xff]
      %v256 = vld [vmem:[%s194 + $0x1c8] sm:$0xff]
      %v257 = vld [vmem:[%s194 + $0x1d0] sm:$0xff]
      %v258 = vld [vmem:[%s194 + $0x1d8] sm:$0xff]
      %v259 = vld [vmem:[%s194 + $0x1e0] sm:$0xff]
      %v260 = vld [vmem:[%s194 + $0x1e8] sm:$0xff]
      %v261 = vld [vmem:[%s194 + $0x1f0] sm:$0xff]
      %v262 = vld [vmem:[%s194 + $0x1f8] sm:$0xff]
      %v263 = vld [vmem:[%s194 + $0x200] sm:$0xff]
      %v264 = vld [vmem:[%s194 + $0x208] sm:$0xff]
      %v265 = vld [vmem:[%s194 + $0x210] sm:$0xff]
      %v266 = vld [vmem:[%s194 + $0x218] sm:$0xff]
      %v267 = vld [vmem:[%s194 + $0x220] sm:$0xff]
      %v268 = vld [vmem:[%s194 + $0x228] sm:$0xff]
      %v269 = vld [vmem:[%s194 + $0x230] sm:$0xff]
      %v270 = vld [vmem:[%s194 + $0x238] sm:$0xff]
      %v271 = vld [vmem:[%s194 + $0x240] sm:$0xff]
      %v272 = vld [vmem:[%s194 + $0x248] sm:$0xff]
      %v273 = vld [vmem:[%s194 + $0x250] sm:$0xff]
      %v274 = vld [vmem:[%s194 + $0x258] sm:$0xff]
      %v275 = vld [vmem:[%s194 + $0x260] sm:$0xff]
      %v276 = vld [vmem:[%s194 + $0x268] sm:$0xff]
      %v277 = vld [vmem:[%s194 + $0x270] sm:$0xff]
      %v278 = vld [vmem:[%s194 + $0x278] sm:$0xff]
      %v279 = vld [vmem:[%s194 + $0x280] sm:$0xff]
      %v280 = vld [vmem:[%s194 + $0x288] sm:$0xff]
      %v281 = vld [vmem:[%s194 + $0x290] sm:$0xff]
      %v282 = vld [vmem:[%s194 + $0x298] sm:$0xff]
      %v283 = vld [vmem:[%s194 + $0x2a0] sm:$0xff]
      %v284 = vld [vmem:[%s194 + $0x2a8] sm:$0xff]
      %v285 = vld [vmem:[%s194 + $0x2b0] sm:$0xff]
      %v286 = vld [vmem:[%s194 + $0x2b8] sm:$0xff]
      %v287 = vld [vmem:[%s194 + $0x2c0] sm:$0xff]
      %v288 = vld [vmem:[%s194 + $0x2c8] sm:$0xff]
      %v289 = vld [vmem:[%s194 + $0x2d0] sm:$0xff]
      %v290 = vld [vmem:[%s194 + $0x2d8] sm:$0xff]
      %v291 = vld [vmem:[%s194 + $0x2e0] sm:$0xff]
      %v292 = vld [vmem:[%s194 + $0x2e8] sm:$0xff]
      %v293 = vld [vmem:[%s194 + $0x2f0] sm:$0xff]
      %v294 = vld [vmem:[%s194 + $0x2f8] sm:$0xff]
      %v295 = vld [vmem:[%s194 + $0x300] sm:$0xff]
      %v296 = vld [vmem:[%s194 + $0x308] sm:$0xff]
      %v297 = vld [vmem:[%s194 + $0x310] sm:$0xff]
      %v298 = vld [vmem:[%s194 + $0x318] sm:$0xff]
      %v299 = vld [vmem:[%s194 + $0x320] sm:$0xff]
      %v300 = vld [vmem:[%s194 + $0x328] sm:$0xff]
      %v301 = vld [vmem:[%s194 + $0x330] sm:$0xff]
      %v302 = vld [vmem:[%s194 + $0x338] sm:$0xff]
      %v303 = vld [vmem:[%s194 + $0x340] sm:$0xff]
      %v304 = vld [vmem:[%s194 + $0x348] sm:$0xff]
      %v305 = vld [vmem:[%s194 + $0x350] sm:$0xff]
      %v306 = vld [vmem:[%s194 + $0x358] sm:$0xff]
      %v307 = vld [vmem:[%s194 + $0x360] sm:$0xff]
      %v308 = vld [vmem:[%s194 + $0x368] sm:$0xff]
      %v309 = vld [vmem:[%s194 + $0x370] sm:$0xff]
      %v310 = vld [vmem:[%s194 + $0x378] sm:$0xff]
      %v311 = vld [vmem:[%s194 + $0x380] sm:$0xff]
      %v312 = vld [vmem:[%s194 + $0x388] sm:$0xff]
      %v313 = vld [vmem:[%s194 + $0x390] sm:$0xff]
      %v314 = vld [vmem:[%s194 + $0x398] sm:$0xff]
      %v315 = vld [vmem:[%s194 + $0x3a0] sm:$0xff]
      %v316 = vld [vmem:[%s194 + $0x3a8] sm:$0xff]
      %v317 = vld [vmem:[%s194 + $0x3b0] sm:$0xff]
      %v318 = vld [vmem:[%s194 + $0x3b8] sm:$0xff]
      %v319 = vld [vmem:[%s194 + $0x3c0] sm:$0xff]
      %v320 = vld [vmem:[%s194 + $0x3c8] sm:$0xff]
      %v321 = vld [vmem:[%s194 + $0x3d0] sm:$0xff]
      %v322 = vld [vmem:[%s194 + $0x3d8] sm:$0xff]
      %v323 = vld [vmem:[%s194 + $0x3e0] sm:$0xff]
      %v324 = vld [vmem:[%s194 + $0x3e8] sm:$0xff]
      %v325 = vld [vmem:[%s194 + $0x3f0] sm:$0xff]
      %v326 = vld [vmem:[%s194 + $0x3f8] sm:$0xff]
      %v328 = vlaneseq
      %v329 = vshrl.u32 %v328, 7
      %v330 = vsub.s32 0, %v329
      %v331 = vrot.slane %v198, %v330
      %v332 = vlaneseq
      %v333 = vshrl.u32 %v332, 7
      %v334 = vsub.s32 1, %v333
      %v335 = vrot.slane %v198, %v334
      %v336 = vlaneseq
      %v337 = vshrl.u32 %v336, 7
      %v338 = vsub.s32 2, %v337
      %v339 = vrot.slane %v198, %v338
      %v340 = vlaneseq
      %v341 = vshrl.u32 %v340, 7
      %v342 = vsub.s32 3, %v341
      %v343 = vrot.slane %v198, %v342
      %v344 = vlaneseq
      %v345 = vshrl.u32 %v344, 7
      %v346 = vsub.s32 4, %v345
      %v347 = vrot.slane %v198, %v346
      %v348 = vlaneseq
      %v349 = vshrl.u32 %v348, 7
      %v350 = vsub.s32 5, %v349
      %v351 = vrot.slane %v198, %v350
      %v352 = vlaneseq
      %v353 = vshrl.u32 %v352, 7
      %v354 = vsub.s32 6, %v353
      %v355 = vrot.slane %v198, %v354
      %v356 = vlaneseq
      %v357 = vshrl.u32 %v356, 7
      %v358 = vsub.s32 7, %v357
      %v359 = vrot.slane %v198, %v358
      %368 = vmatprep.subr.mxu0 0.0
      %369 = vmatpush1.msra.mxu0 %v214
      %370 = vmatprep.subr.mxu0 0.0
      %371 = vmatpush1.msra.mxu0 %v213
      %372 = vmatprep.subr.mxu0 0.0
      %373 = vmatpush1.msra.mxu0 %v212
      %374 = vmatprep.subr.mxu0 0.0
      %375 = vmatpush1.msra.mxu0 %v211
      %376 = vmatprep.subr.mxu0 0.0
      %377 = vmatpush1.msra.mxu0 %v210
      %378 = vmatprep.subr.mxu0 0.0
      %379 = vmatpush1.msra.mxu0 %v209
      %380 = vmatprep.subr.mxu0 0.0
      %381 = vmatpush1.msra.mxu0 %v208
      %382 = vmatprep.subr.mxu0 0.0
      %383 = vmatpush1.msra.mxu0 %v207
      %384 = vmatprep.subr.mxu0 0.0
      %385 = vmatpush1.msra.mxu0 %v206
      %386 = vmatprep.subr.mxu0 0.0
      %387 = vmatpush1.msra.mxu0 %v205
      %388 = vmatprep.subr.mxu0 0.0
      %389 = vmatpush1.msra.mxu0 %v204
      %390 = vmatprep.subr.mxu0 0.0
      %391 = vmatpush1.msra.mxu0 %v203
      %392 = vmatprep.subr.mxu0 0.0
      %393 = vmatpush1.msra.mxu0 %v202
      %394 = vmatprep.subr.mxu0 0.0
      %395 = vmatpush1.msra.mxu0 %v201
      %396 = vmatprep.subr.mxu0 0.0
      %397 = vmatpush1.msra.mxu0 %v200
      %398 = vmatprep.subr.mxu0 0.0
      %399 = vmatpush1.msra.mxu0 %v199
      %400 = vmatprep.subr.mxu0 0.0
      %401 = vmatpush2.msra.mxu0 %v230
      %402 = vmatprep.subr.mxu0 0.0
      %403 = vmatpush2.msra.mxu0 %v229
      %404 = vmatprep.subr.mxu0 0.0
      %405 = vmatpush2.msra.mxu0 %v228
      %406 = vmatprep.subr.mxu0 0.0
      %407 = vmatpush2.msra.mxu0 %v227
      %408 = vmatprep.subr.mxu0 0.0
      %409 = vmatpush2.msra.mxu0 %v226
      %410 = vmatprep.subr.mxu0 0.0
      %411 = vmatpush2.msra.mxu0 %v225
      %412 = vmatprep.subr.mxu0 0.0
      %413 = vmatpush2.msra.mxu0 %v224
      %414 = vmatprep.subr.mxu0 0.0
      %415 = vmatpush2.msra.mxu0 %v223
      %416 = vmatprep.subr.mxu0 0.0
      %417 = vmatpush2.msra.mxu0 %v222
      %418 = vmatprep.subr.mxu0 0.0
      %419 = vmatpush2.msra.mxu0 %v221
      %420 = vmatprep.subr.mxu0 0.0
      %421 = vmatpush2.msra.mxu0 %v220
      %422 = vmatprep.subr.mxu0 0.0
      %423 = vmatpush2.msra.mxu0 %v219
      %424 = vmatprep.subr.mxu0 0.0
      %425 = vmatpush2.msra.mxu0 %v218
      %426 = vmatprep.subr.mxu0 0.0
      %427 = vmatpush2.msra.mxu0 %v217
      %428 = vmatprep.subr.mxu0 0.0
      %429 = vmatpush2.msra.mxu0 %v216
      %430 = vmatprep.subr.mxu0 0.0
      %431 = vmatpush2.msra.mxu0 %v215
      %432 = vmatprep.mubr.f32.mxu0 %v335
      %433 = vmatmul.mubr.f32.gmra.mxu0 %v331
      %v434 = vpop.f32.mrf.mxu0
      %v435 = vadd.f32 0.0, %v434
      %v436 = vpop.f32.mrf.mxu0
      %437 = vdwg.mxu0
      %438 = vmatprep.subr.mxu0 0.0
      %439 = vmatpush1.msra.mxu0 %v246
      %440 = vmatprep.subr.mxu0 0.0
      %441 = vmatpush1.msra.mxu0 %v245
      %442 = vmatprep.subr.mxu0 0.0
      %443 = vmatpush1.msra.mxu0 %v244
      %444 = vmatprep.subr.mxu0 0.0
      %445 = vmatpush1.msra.mxu0 %v243
      %446 = vmatprep.subr.mxu0 0.0
      %447 = vmatpush1.msra.mxu0 %v242
      %448 = vmatprep.subr.mxu0 0.0
      %449 = vmatpush1.msra.mxu0 %v241
      %450 = vmatprep.subr.mxu0 0.0
      %451 = vmatpush1.msra.mxu0 %v240
      %452 = vmatprep.subr.mxu0 0.0
      %453 = vmatpush1.msra.mxu0 %v239
      %454 = vmatprep.subr.mxu0 0.0
      %455 = vmatpush1.msra.mxu0 %v238
      %456 = vmatprep.subr.mxu0 0.0
      %457 = vmatpush1.msra.mxu0 %v237
      %458 = vmatprep.subr.mxu0 0.0
      %459 = vmatpush1.msra.mxu0 %v236
      %460 = vmatprep.subr.mxu0 0.0
      %461 = vmatpush1.msra.mxu0 %v235
      %462 = vmatprep.subr.mxu0 0.0
      %463 = vmatpush1.msra.mxu0 %v234
      %464 = vmatprep.subr.mxu0 0.0
      %465 = vmatpush1.msra.mxu0 %v233
      %466 = vmatprep.subr.mxu0 0.0
      %467 = vmatpush1.msra.mxu0 %v232
      %468 = vmatprep.subr.mxu0 0.0
      %469 = vmatpush1.msra.mxu0 %v231
      %470 = vmatprep.subr.mxu0 0.0
      %471 = vmatpush2.msra.mxu0 %v262
      %472 = vmatprep.subr.mxu0 0.0
      %473 = vmatpush2.msra.mxu0 %v261
      %474 = vmatprep.subr.mxu0 0.0
      %475 = vmatpush2.msra.mxu0 %v260
      %476 = vmatprep.subr.mxu0 0.0
      %477 = vmatpush2.msra.mxu0 %v259
      %478 = vmatprep.subr.mxu0 0.0
      %479 = vmatpush2.msra.mxu0 %v258
      %480 = vmatprep.subr.mxu0 0.0
      %481 = vmatpush2.msra.mxu0 %v257
      %482 = vmatprep.subr.mxu0 0.0
      %483 = vmatpush2.msra.mxu0 %v256
      %484 = vmatprep.subr.mxu0 0.0
      %485 = vmatpush2.msra.mxu0 %v255
      %486 = vmatprep.subr.mxu0 0.0
      %487 = vmatpush2.msra.mxu0 %v254
      %488 = vmatprep.subr.mxu0 0.0
      %489 = vmatpush2.msra.mxu0 %v253
      %490 = vmatprep.subr.mxu0 0.0
      %491 = vmatpush2.msra.mxu0 %v252
      %492 = vmatprep.subr.mxu0 0.0
      %493 = vmatpush2.msra.mxu0 %v251
      %494 = vmatprep.subr.mxu0 0.0
      %495 = vmatpush2.msra.mxu0 %v250
      %496 = vmatprep.subr.mxu0 0.0
      %497 = vmatpush2.msra.mxu0 %v249
      %498 = vmatprep.subr.mxu0 0.0
      %499 = vmatpush2.msra.mxu0 %v248
      %500 = vmatprep.subr.mxu0 0.0
      %501 = vmatpush2.msra.mxu0 %v247
      %502 = vmatprep.mubr.f32.mxu0 %v343
      %503 = vmatmul.mubr.f32.gmra.mxu0 %v339
      %v504 = vpop.f32.mrf.mxu0
      %v505 = vadd.f32 %v435, %v504
      %v506 = vpop.f32.mrf.mxu0
      %507 = vdwg.mxu0
      %508 = vmatprep.subr.mxu0 0.0
      %509 = vmatpush1.msra.mxu0 %v278
      %510 = vmatprep.subr.mxu0 0.0
      %511 = vmatpush1.msra.mxu0 %v277
      %512 = vmatprep.subr.mxu0 0.0
      %513 = vmatpush1.msra.mxu0 %v276
      %514 = vmatprep.subr.mxu0 0.0
      %515 = vmatpush1.msra.mxu0 %v275
      %516 = vmatprep.subr.mxu0 0.0
      %517 = vmatpush1.msra.mxu0 %v274
      %518 = vmatprep.subr.mxu0 0.0
      %519 = vmatpush1.msra.mxu0 %v273
      %520 = vmatprep.subr.mxu0 0.0
      %521 = vmatpush1.msra.mxu0 %v272
      %522 = vmatprep.subr.mxu0 0.0
      %523 = vmatpush1.msra.mxu0 %v271
      %524 = vmatprep.subr.mxu0 0.0
      %525 = vmatpush1.msra.mxu0 %v270
      %526 = vmatprep.subr.mxu0 0.0
      %527 = vmatpush1.msra.mxu0 %v269
      %528 = vmatprep.subr.mxu0 0.0
      %529 = vmatpush1.msra.mxu0 %v268
      %530 = vmatprep.subr.mxu0 0.0
      %531 = vmatpush1.msra.mxu0 %v267
      %532 = vmatprep.subr.mxu0 0.0
      %533 = vmatpush1.msra.mxu0 %v266
      %534 = vmatprep.subr.mxu0 0.0
      %535 = vmatpush1.msra.mxu0 %v265
      %536 = vmatprep.subr.mxu0 0.0
      %537 = vmatpush1.msra.mxu0 %v264
      %538 = vmatprep.subr.mxu0 0.0
      %539 = vmatpush1.msra.mxu0 %v263
      %540 = vmatprep.subr.mxu0 0.0
      %541 = vmatpush2.msra.mxu0 %v294
      %542 = vmatprep.subr.mxu0 0.0
      %543 = vmatpush2.msra.mxu0 %v293
      %544 = vmatprep.subr.mxu0 0.0
      %545 = vmatpush2.msra.mxu0 %v292
      %546 = vmatprep.subr.mxu0 0.0
      %547 = vmatpush2.msra.mxu0 %v291
      %548 = vmatprep.subr.mxu0 0.0
      %549 = vmatpush2.msra.mxu0 %v290
      %550 = vmatprep.subr.mxu0 0.0
      %551 = vmatpush2.msra.mxu0 %v289
      %552 = vmatprep.subr.mxu0 0.0
      %553 = vmatpush2.msra.mxu0 %v288
      %554 = vmatprep.subr.mxu0 0.0
      %555 = vmatpush2.msra.mxu0 %v287
      %556 = vmatprep.subr.mxu0 0.0
      %557 = vmatpush2.msra.mxu0 %v286
      %558 = vmatprep.subr.mxu0 0.0
      %559 = vmatpush2.msra.mxu0 %v285
      %560 = vmatprep.subr.mxu0 0.0
      %561 = vmatpush2.msra.mxu0 %v284
      %562 = vmatprep.subr.mxu0 0.0
      %563 = vmatpush2.msra.mxu0 %v283
      %564 = vmatprep.subr.mxu0 0.0
      %565 = vmatpush2.msra.mxu0 %v282
      %566 = vmatprep.subr.mxu0 0.0
      %567 = vmatpush2.msra.mxu0 %v281
      %568 = vmatprep.subr.mxu0 0.0
      %569 = vmatpush2.msra.mxu0 %v280
      %570 = vmatprep.subr.mxu0 0.0
      %571 = vmatpush2.msra.mxu0 %v279
      %572 = vmatprep.mubr.f32.mxu0 %v351
      %573 = vmatmul.mubr.f32.gmra.mxu0 %v347
      %v574 = vpop.f32.mrf.mxu0
      %v575 = vadd.f32 %v505, %v574
      %v576 = vpop.f32.mrf.mxu0
      %577 = vdwg.mxu0
      %578 = vmatprep.subr.mxu0 0.0
      %579 = vmatpush1.msra.mxu0 %v310
      %580 = vmatprep.subr.mxu0 0.0
      %581 = vmatpush1.msra.mxu0 %v309
      %582 = vmatprep.subr.mxu0 0.0
      %583 = vmatpush1.msra.mxu0 %v308
      %584 = vmatprep.subr.mxu0 0.0
      %585 = vmatpush1.msra.mxu0 %v307
      %586 = vmatprep.subr.mxu0 0.0
      %587 = vmatpush1.msra.mxu0 %v306
      %588 = vmatprep.subr.mxu0 0.0
      %589 = vmatpush1.msra.mxu0 %v305
      %590 = vmatprep.subr.mxu0 0.0
      %591 = vmatpush1.msra.mxu0 %v304
      %592 = vmatprep.subr.mxu0 0.0
      %593 = vmatpush1.msra.mxu0 %v303
      %594 = vmatprep.subr.mxu0 0.0
      %595 = vmatpush1.msra.mxu0 %v302
      %596 = vmatprep.subr.mxu0 0.0
      %597 = vmatpush1.msra.mxu0 %v301
      %598 = vmatprep.subr.mxu0 0.0
      %599 = vmatpush1.msra.mxu0 %v300
      %600 = vmatprep.subr.mxu0 0.0
      %601 = vmatpush1.msra.mxu0 %v299
      %602 = vmatprep.subr.mxu0 0.0
      %603 = vmatpush1.msra.mxu0 %v298
      %604 = vmatprep.subr.mxu0 0.0
      %605 = vmatpush1.msra.mxu0 %v297
      %606 = vmatprep.subr.mxu0 0.0
      %607 = vmatpush1.msra.mxu0 %v296
      %608 = vmatprep.subr.mxu0 0.0
      %609 = vmatpush1.msra.mxu0 %v295
      %610 = vmatprep.subr.mxu0 0.0
      %611 = vmatpush2.msra.mxu0 %v326
      %612 = vmatprep.subr.mxu0 0.0
      %613 = vmatpush2.msra.mxu0 %v325
      %614 = vmatprep.subr.mxu0 0.0
      %615 = vmatpush2.msra.mxu0 %v324
      %616 = vmatprep.subr.mxu0 0.0
      %617 = vmatpush2.msra.mxu0 %v323
      %618 = vmatprep.subr.mxu0 0.0
      %619 = vmatpush2.msra.mxu0 %v322
      %620 = vmatprep.subr.mxu0 0.0
      %621 = vmatpush2.msra.mxu0 %v321
      %622 = vmatprep.subr.mxu0 0.0
      %623 = vmatpush2.msra.mxu0 %v320
      %624 = vmatprep.subr.mxu0 0.0
      %625 = vmatpush2.msra.mxu0 %v319
      %626 = vmatprep.subr.mxu0 0.0
      %627 = vmatpush2.msra.mxu0 %v318
      %628 = vmatprep.subr.mxu0 0.0
      %629 = vmatpush2.msra.mxu0 %v317
      %630 = vmatprep.subr.mxu0 0.0
      %631 = vmatpush2.msra.mxu0 %v316
      %632 = vmatprep.subr.mxu0 0.0
      %633 = vmatpush2.msra.mxu0 %v315
      %634 = vmatprep.subr.mxu0 0.0
      %635 = vmatpush2.msra.mxu0 %v314
      %636 = vmatprep.subr.mxu0 0.0
      %637 = vmatpush2.msra.mxu0 %v313
      %638 = vmatprep.subr.mxu0 0.0
      %639 = vmatpush2.msra.mxu0 %v312
      %640 = vmatprep.subr.mxu0 0.0
      %641 = vmatpush2.msra.mxu0 %v311
      %642 = vmatprep.mubr.f32.mxu0 %v359
      %643 = vmatmul.mubr.f32.gmra.mxu0 %v355
      %v644 = vpop.f32.mrf.mxu0
      %v645 = vadd.f32 %v575, %v644
      %v646 = vpop.f32.mrf.mxu0
      %647 = vdwg.mxu0
      %v648 = vld [vmem:[#allocation2] sm:$0x1]
      %650 = vset.pattern.permute.xlu0 0
      %651 = vperm.xlu0 %650, %v648
      %v652 = vpop.permute.xlu0 %651
      %v654 = vlaneseq
      %v655 = vshrl.u32 %v654, 7
      %v656 = vsub.s32 0, %v655
      %v657 = vrot.slane %v652, %v656
      %v658 = vmul.f32 %v645, %v657
      %v659 = vld [vmem:[#allocation3] sm:$0x1]
      %661 = vset.pattern.permute.xlu0 0
      %662 = vperm.xlu0 %661, %v659
      %v663 = vpop.permute.xlu0 %662
      %v665 = vlaneseq
      %v666 = vshrl.u32 %v665, 7
      %v667 = vsub.s32 0, %v666
      %v668 = vrot.slane %v663, %v667
      %v669 = vadd.f32 %v658, %v668
      %vm670 = vcmask 24576
      %671 = vst.msk [vmem:[%s197] sm:$0x1] %vm670, %v669
      %p672 = scmp.lt.s32.totalorder %s19, 1
      %s673 = scalar_select %p672, %s19, 1
      %s674 = scalar_lea.vmem %s4, %s673
      // Predicated region
      $region37: #{_lambda_.9} parent=35 // pred_check
        %p675 = pneg %p126
      $region38: #{_lambda_.9} parent=35 // pred_check_branch
        %677 = sbr.rel (%p675) target = $region40
      $region39: #{_lambda_.9} parent=35 // pred_region
        _
      $region40: #{_lambda_.9} parent=35 // pred_fallthru
        _
    $region36: #{_lambda_.9} parent=5 // pred_fallthru
      _
    %p678 = scmp.le.s32.totalorder 2, %s14
    // Predicated region
    $region41: #{_lambda_.9} parent=5 // pred_check
      %p679 = pneg %p678
    $region42: #{_lambda_.9} parent=5 // pred_check_branch
      %681 = sbr.rel (%p679) target = $region44
    $region43: #{_lambda_.9} parent=5 // pred_region
      %s682 = ssub.s32 %s14, 2
      // Predicated region
      $region45: #{_lambda_.9} parent=43 // pred_check
        %p683 = pneg %p132
      $region46: #{_lambda_.9} parent=43 // pred_check_branch
        %685 = sbr.rel (%p683) target = $region48
      $region47: #{_lambda_.9} parent=43 // pred_region
        %p686 = scmp.lt.s32.totalorder %s20, 1
        %s687 = scalar_select %p686, %s20, 1
        %s688 = scalar_lea.vmem %s4, %s687
      $region48: #{_lambda_.9} parent=43 // pred_fallthru
        _
    $region44: #{_lambda_.9} parent=5 // pred_fallthru
      _
  $region6: #{_lambda_.9} parent=0 // loop_footer
    %s18 = sadd.s32 1, %s14
  $region7: #{_lambda_.9} parent=0 // loop_footer_branch
    %13 = sbr.rel target = $region3
  $region8: #{_lambda_.9} parent=0 // loop_exit
    _

</llo_original>
